<compile_context>
chip_gen: v5e
topology: v5e:2x2
jax: 0.10.0
libtpu: 0.0.40
codegen_flags: <defaults>
</compile_context>

<pallas_src>
import functools
import math

import jax
import jax.numpy as jnp
from jax import lax
from jax.experimental import pallas as pl
from jax.experimental.pallas import tpu as pltpu


def _transformer_kernel(x_ref,
                        ln1_w, ln1_b, wqkv, bqkv, wo, bo,
                        ln2_w, ln2_b, wfc, bfc, wpr, bpr,
                        o_ref, *, n_head, causal):
    """One (batch_tile, layer) grid step. Activations live in o_ref across layers."""
    layer = pl.program_id(1)

    # Layer 0: seed the resident activation tile from the input.
    @pl.when(layer == 0)
    def _():
        o_ref[...] = x_ref[...]

    Bb, L, D = o_ref.shape
    H = n_head
    hd = D // H
    T = Bb * L
    scale = 1.0 / math.sqrt(hd)

    # Resident activations, flattened to token rows for the matmuls.
    x = o_ref[...].astype(jnp.float32).reshape(T, D)          # (T, D) fp32

    def layernorm(v, w_ref, b_ref):                            # fp32 stats, eps=1e-5
        mu = jnp.mean(v, axis=-1, keepdims=True)
        var = jnp.mean(jnp.square(v - mu), axis=-1, keepdims=True)
        return (v - mu) * lax.rsqrt(var + 1e-5) * w_ref[0] + b_ref[0]

    # ---------------- self-attention ----------------
    h1 = layernorm(x, ln1_w, ln1_b).astype(jnp.bfloat16)
    qkv = jnp.dot(h1, wqkv[0], preferred_element_type=jnp.float32) + bqkv[0]   # (T, 3D) fp32

    def split_heads(m2d):
        # (T, D) -> (H*Bb, L, hd); head h lives in columns [h*hd, (h+1)*hd).
        m3 = m2d.reshape(Bb, L, D)
        return jnp.concatenate([m3[:, :, h * hd:(h + 1) * hd] for h in range(H)], axis=0)

    q = split_heads(qkv[:, 0 * D:1 * D]).astype(jnp.bfloat16)   # (Z, L, hd), Z = H*Bb
    k = split_heads(qkv[:, 1 * D:2 * D]).astype(jnp.bfloat16)
    v = split_heads(qkv[:, 2 * D:3 * D]).astype(jnp.bfloat16)

    s = jnp.einsum('zqd,zkd->zqk', q, k,
                   preferred_element_type=jnp.float32) * scale   # (Z, L, L) fp32
    if causal:
        row = lax.broadcasted_iota(jnp.int32, (L, L), 0)
        col = lax.broadcasted_iota(jnp.int32, (L, L), 1)
        s = jnp.where(col <= row, s, jnp.float32(-1e30))

    m = jnp.max(s, axis=-1, keepdims=True)
    p = jnp.exp(s - m)
    inv_denom = pl.reciprocal(jnp.sum(p, axis=-1, keepdims=True), approx=True)
    ctx = jnp.einsum('zqk,zkd->zqd', p.astype(jnp.bfloat16), v,
                     preferred_element_type=jnp.float32) * inv_denom          # (Z, L, hd)

    attn = jnp.concatenate([ctx[h * Bb:(h + 1) * Bb] for h in range(H)], axis=-1)  # (Bb, L, D)
    attn = jnp.dot(attn.reshape(T, D).astype(jnp.bfloat16), wo[0],
                   preferred_element_type=jnp.float32) + bo[0]
    x = x + attn                                                # residual 1 (fp32)

    # ---------------- MLP: c_fc -> QuickGELU -> c_proj ----------------
    h2 = layernorm(x, ln2_w, ln2_b).astype(jnp.bfloat16)
    f = jnp.dot(h2, wfc[0], preferred_element_type=jnp.float32) + bfc[0]
    f = (f * jax.nn.sigmoid(1.702 * f)).astype(jnp.bfloat16)    # QuickGELU in fp32
    f = jnp.dot(f, wpr[0], preferred_element_type=jnp.float32) + bpr[0]
    x = x + f                                                   # residual 2 (fp32)

    o_ref[...] = x.reshape(Bb, L, D).astype(o_ref.dtype)


def _pick_batch_tile(n_batch, seq_len, target_rows=256):
    """Largest divisor of n_batch such that batch_tile * seq_len <= ~target token rows."""
    best = 1
    cap = max(target_rows, seq_len)
    for cand in range(1, n_batch + 1):
        if n_batch % cand == 0 and cand * seq_len <= cap:
            best = cand
    return best


def transformer_forward(x_lnd, layer_params, n_head, *, causal=True, batch_tile=None):
    """Matches Transformer.forward: x is (L, N, D), returns (L, N, D)."""
    L, N, D = x_lnd.shape
    (ln1_w, ln1_b, wqkv, bqkv, wo, bo, ln2_w, ln2_b, wfc, bfc, wpr, bpr) = layer_params
    layers = wqkv.shape[0]
    assert D % n_head == 0

    Bb = batch_tile if batch_tile is not None else _pick_batch_tile(N, L)
    assert N % Bb == 0

    # Single transpose in/out for the whole stack (kernel works batch-major).
    x = jnp.transpose(x_lnd, (1, 0, 2))                         # (N, L, D)

    act_spec = pl.BlockSpec((Bb, L, D), lambda b, l: (b, 0, 0))

    def wspec(arr):
        rest = arr.ndim - 1
        return pl.BlockSpec((1,) + arr.shape[1:],
                            lambda b, l, _n=rest: (l,) + (0,) * _n)

    kernel = functools.partial(_transformer_kernel, n_head=n_head, causal=causal)

    out = pl.pallas_call(
        kernel,
        out_shape=jax.ShapeDtypeStruct((N, L, D), x.dtype),
        grid=(N // Bb, layers),
        in_specs=[act_spec] + [wspec(p) for p in layer_params],
        out_specs=act_spec,
        compiler_params=pltpu.CompilerParams(
            dimension_semantics=("parallel", "arbitrary"),
            vmem_limit_bytes=64 * 1024 * 1024,
        ),
    )(x, *layer_params)

    return jnp.transpose(out, (1, 0, 2))


def init_params(key, width, layers):
    """Deterministic synthetic weights, shapes matching the PyTorch module.

    Matmul weights are pre-transposed to (in, out), stacked over layers, stored bf16.
    LayerNorm params and biases stay fp32.
    """
    d = width

    def rnd(k, shape):
        return jax.random.normal(k, shape, jnp.float32) * 0.02

    ks = jax.random.split(key, 8)
    w_in = rnd(ks[0], (layers, 3 * d, d))       # in_proj_weight (rows = [q; k; v])
    b_in = rnd(ks[1], (layers, 3 * d))          # in_proj_bias
    w_out = rnd(ks[2], (layers, d, d))          # out_proj.weight
    b_out = rnd(ks[3], (layers, d))
    w_fc = rnd(ks[4], (layers, 4 * d, d))       # c_fc.weight
    b_fc = rnd(ks[5], (layers, 4 * d))
    w_pr = rnd(ks[6], (layers, d, 4 * d))       # c_proj.weight
    b_pr = rnd(ks[7], (layers, d))

    params = (
        jnp.ones((layers, 1, d), jnp.float32),                       # ln_1.weight
        jnp.zeros((layers, 1, d), jnp.float32),                      # ln_1.bias
        jnp.transpose(w_in, (0, 2, 1)).astype(jnp.bfloat16),         # W_qkv (d, 3d), cols [q|k|v]
        b_in[:, None, :],                                            # b_qkv (1, 3d)
        jnp.transpose(w_out, (0, 2, 1)).astype(jnp.bfloat16),        # W_o (d, d)
        b_out[:, None, :],
        jnp.ones((layers, 1, d), jnp.float32),                       # ln_2.weight
        jnp.zeros((layers, 1, d), jnp.float32),                      # ln_2.bias
        jnp.transpose(w_fc, (0, 2, 1)).astype(jnp.bfloat16),         # W_fc (d, 4d)
        b_fc[:, None, :],
        jnp.transpose(w_pr, (0, 2, 1)).astype(jnp.bfloat16),         # W_proj (4d, d)
        b_pr[:, None, :],
    )
    return params


def transformer_reference(x_lnd, layer_params, n_head, *, causal=True):
    """Pure-JAX fp32 reference (same math as the PyTorch module)."""
    ln1_w, ln1_b, wqkv, bqkv, wo, bo, ln2_w, ln2_b, wfc, bfc, wpr, bpr = layer_params
    x = jnp.transpose(x_lnd, (1, 0, 2)).astype(jnp.float32)     # (N, L, D)
    N, L, D = x.shape
    hd = D // n_head
    layers = wqkv.shape[0]
    mask = jnp.where(jnp.arange(L)[:, None] >= jnp.arange(L)[None, :], 0.0, -1e30)

    def ln(v, w, b):
        mu = v.mean(-1, keepdims=True)
        var = ((v - mu) ** 2).mean(-1, keepdims=True)
        return (v - mu) / jnp.sqrt(var + 1e-5) * w[0] + b[0]

    for l in range(layers):
        h = ln(x, ln1_w[l], ln1_b[l])
        qkv = h @ wqkv[l].astype(jnp.float32) + bqkv[l]
        q, k, v = jnp.split(qkv, 3, axis=-1)
        q = q.reshape(N, L, n_head, hd).transpose(0, 2, 1, 3) / math.sqrt(hd)
        k = k.reshape(N, L, n_head, hd).transpose(0, 2, 1, 3)
        v = v.reshape(N, L, n_head, hd).transpose(0, 2, 1, 3)
        s = jnp.einsum('nhqd,nhkd->nhqk', q, k)
        if causal:
            s = s + mask
        p = jax.nn.softmax(s, axis=-1)
        ctx = jnp.einsum('nhqk,nhkd->nhqd', p, v).transpose(0, 2, 1, 3).reshape(N, L, D)
        x = x + (ctx @ wo[l].astype(jnp.float32) + bo[l])
        h2 = ln(x, ln2_w[l], ln2_b[l])
        f = h2 @ wfc[l].astype(jnp.float32) + bfc[l]
        f = f * jax.nn.sigmoid(1.702 * f)
        x = x + (f @ wpr[l].astype(jnp.float32) + bpr[l])
    return jnp.transpose(x, (1, 0, 2))


if __name__ == "__main__":
    # Small shapes consistent with the module: seq=8, batch=2, width=32, heads=4, layers=2.
    L, N, D, HEADS, LAYERS = 8, 2, 32, 4, 2

    key = jax.random.PRNGKey(0)
    kx, kp = jax.random.split(key)
    x = jax.random.normal(kx, (L, N, D), jnp.float32)           # (seq, batch, width)
    params = init_params(kp, D, LAYERS)

    out = transformer_forward(x, params, HEADS, causal=True)
    out = jax.block_until_ready(out)
    assert out.shape == (L, N, D) and out.dtype == jnp.float32

    # Loose-tolerance parity check vs fp32 reference (kernel uses bf16 matmul operands).
    ref = jax.block_until_ready(transformer_reference(x, params, HEADS, causal=True))
    assert jnp.max(jnp.abs(out - ref)) < 5e-2

    print("KERNEL_OK")
</pallas_src>

<mosaic_0001>
module attributes {stable_mosaic.version = 11 : i64} {
  func.func @_transformer_kernel(%arg0: i32, %arg1: i32, %arg2: memref<2x8x32xf32, #tpu.memory_space<vmem>>, %arg3: memref<1x1x32xf32, #tpu.memory_space<vmem>>, %arg4: memref<1x1x32xf32, #tpu.memory_space<vmem>>, %arg5: memref<1x32x96xbf16, #tpu.memory_space<vmem>>, %arg6: memref<1x1x96xf32, #tpu.memory_space<vmem>>, %arg7: memref<1x32x32xbf16, #tpu.memory_space<vmem>>, %arg8: memref<1x1x32xf32, #tpu.memory_space<vmem>>, %arg9: memref<1x1x32xf32, #tpu.memory_space<vmem>>, %arg10: memref<1x1x32xf32, #tpu.memory_space<vmem>>, %arg11: memref<1x32x128xbf16, #tpu.memory_space<vmem>>, %arg12: memref<1x1x128xf32, #tpu.memory_space<vmem>>, %arg13: memref<1x128x32xbf16, #tpu.memory_space<vmem>>, %arg14: memref<1x1x32xf32, #tpu.memory_space<vmem>>, %arg15: memref<2x8x32xf32, #tpu.memory_space<vmem>>) attributes {dimension_semantics = [#tpu.dimension_semantics<parallel>, #tpu.dimension_semantics<arbitrary>], iteration_bounds = array<i64: 1, 2>, scalar_prefetch = 0 : i64, scratch_operands = 0 : i64, tpu.core_type = #tpu.core_type<tc>, window_params = [{transform_indices = @transform_0, window_bounds = array<i64: 2, 8, 32>}, {transform_indices = @transform_1, window_bounds = array<i64: 1, 1, 32>}, {transform_indices = @transform_2, window_bounds = array<i64: 1, 1, 32>}, {transform_indices = @transform_3, window_bounds = array<i64: 1, 32, 96>}, {transform_indices = @transform_4, window_bounds = array<i64: 1, 1, 96>}, {transform_indices = @transform_5, window_bounds = array<i64: 1, 32, 32>}, {transform_indices = @transform_6, window_bounds = array<i64: 1, 1, 32>}, {transform_indices = @transform_7, window_bounds = array<i64: 1, 1, 32>}, {transform_indices = @transform_8, window_bounds = array<i64: 1, 1, 32>}, {transform_indices = @transform_9, window_bounds = array<i64: 1, 32, 128>}, {transform_indices = @transform_10, window_bounds = array<i64: 1, 1, 128>}, {transform_indices = @transform_11, window_bounds = array<i64: 1, 128, 32>}, {transform_indices = @transform_12, window_bounds = array<i64: 1, 1, 32>}, {transform_indices = @transform_13, window_bounds = array<i64: 2, 8, 32>}]} {
    %c0_i32 = arith.constant 0 : i32
    %0 = arith.cmpi eq, %arg1, %c0_i32 : i32
    %1 = arith.extui %0 : i1 to i32
    %c0_i32_0 = arith.constant 0 : i32
    %2 = arith.cmpi ne, %1, %c0_i32_0 : i32
    scf.if %2 {
      %c0_63 = arith.constant 0 : index
      %c0_64 = arith.constant 0 : index
      %c0_65 = arith.constant 0 : index
      %153 = vector.load %arg2[%c0_63, %c0_64, %c0_65] : memref<2x8x32xf32, #tpu.memory_space<vmem>>, vector<2x8x32xf32>
      %c0_66 = arith.constant 0 : index
      %c0_67 = arith.constant 0 : index
      %c0_68 = arith.constant 0 : index
      %154 = vector.load %arg15[%c0_66, %c0_67, %c0_68] : memref<2x8x32xf32, #tpu.memory_space<vmem>>, vector<2x8x32xf32>
      tpu.vector_store %arg15[%c0_66, %c0_67, %c0_68], %153 {strides = array<i32>} : memref<2x8x32xf32, #tpu.memory_space<vmem>>, vector<2x8x32xf32>,
    } else {
    }
    %c0 = arith.constant 0 : index
    %c0_1 = arith.constant 0 : index
    %c0_2 = arith.constant 0 : index
    %3 = vector.load %arg15[%c0, %c0_1, %c0_2] : memref<2x8x32xf32, #tpu.memory_space<vmem>>, vector<2x8x32xf32>
    %4 = vector.shape_cast %3 : vector<2x8x32xf32> to vector<16x32xf32>
    %cst = arith.constant dense<0.000000e+00> : vector<16xf32>
    %5 = vector.multi_reduction <add>, %4, %cst [1] : vector<16x32xf32> to vector<16xf32>
    %6 = vector.shape_cast %5 : vector<16xf32> to vector<16x1xf32>
    %cst_3 = arith.constant 3.200000e+01 : f32
    %7 = vector.broadcast %cst_3 : f32 to vector<16x1xf32>
    %8 = arith.divf %6, %7 : vector<16x1xf32>
    %9 = vector.broadcast %8 : vector<16x1xf32> to vector<16x32xf32>
    %10 = arith.subf %4, %9 : vector<16x32xf32>
    %11 = arith.mulf %10, %10 : vector<16x32xf32>
    %cst_4 = arith.constant dense<0.000000e+00> : vector<16xf32>
    %12 = vector.multi_reduction <add>, %11, %cst_4 [1] : vector<16x32xf32> to vector<16xf32>
    %13 = vector.shape_cast %12 : vector<16xf32> to vector<16x1xf32>
    %cst_5 = arith.constant 3.200000e+01 : f32
    %14 = vector.broadcast %cst_5 : f32 to vector<16x1xf32>
    %15 = arith.divf %13, %14 : vector<16x1xf32>
    %16 = vector.broadcast %8 : vector<16x1xf32> to vector<16x32xf32>
    %17 = arith.subf %4, %16 : vector<16x32xf32>
    %cst_6 = arith.constant 9.99999974E-6 : f32
    %18 = vector.broadcast %cst_6 : f32 to vector<16x1xf32>
    %19 = arith.addf %15, %18 : vector<16x1xf32>
    %20 = math.rsqrt %19 : vector<16x1xf32>
    %21 = vector.broadcast %20 : vector<16x1xf32> to vector<16x32xf32>
    %22 = arith.mulf %17, %21 : vector<16x32xf32>
    %c0_7 = arith.constant 0 : index
    %c0_8 = arith.constant 0 : index
    %c0_9 = arith.constant 0 : index
    %23 = vector.load %arg3[%c0_7, %c0_8, %c0_9] : memref<1x1x32xf32, #tpu.memory_space<vmem>>, vector<1x1x32xf32>
    %24 = vector.shape_cast %23 : vector<1x1x32xf32> to vector<1x32xf32>
    %25 = vector.broadcast %24 : vector<1x32xf32> to vector<16x32xf32>
    %26 = arith.mulf %22, %25 : vector<16x32xf32>
    %c0_10 = arith.constant 0 : index
    %c0_11 = arith.constant 0 : index
    %c0_12 = arith.constant 0 : index
    %27 = vector.load %arg4[%c0_10, %c0_11, %c0_12] : memref<1x1x32xf32, #tpu.memory_space<vmem>>, vector<1x1x32xf32>
    %28 = vector.shape_cast %27 : vector<1x1x32xf32> to vector<1x32xf32>
    %29 = vector.broadcast %28 : vector<1x32xf32> to vector<16x32xf32>
    %30 = arith.addf %26, %29 : vector<16x32xf32>
    %31 = arith.truncf %30 : vector<16x32xf32> to vector<16x32xbf16>
    %c0_13 = arith.constant 0 : index
    %c0_14 = arith.constant 0 : index
    %c0_15 = arith.constant 0 : index
    %32 = vector.load %arg5[%c0_13, %c0_14, %c0_15] : memref<1x32x96xbf16, #tpu.memory_space<vmem>>, vector<1x32x96xbf16>
    %33 = vector.shape_cast %32 : vector<1x32x96xbf16> to vector<32x96xbf16>
    %cst_16 = arith.constant dense<0.000000e+00> : vector<16x96xf32>
    %34 = tpu.matmul %31, %33, %cst_16 {dimension_numbers = #tpu.dot_dimension_numbers<[1], [0], [0], [1], [0, 0, 1, 1], [], []>} : vector<16x32xbf16>, vector<32x96xbf16>, vector<16x96xf32> -> vector<16x96xf32>
    %c0_17 = arith.constant 0 : index
    %c0_18 = arith.constant 0 : index
    %c0_19 = arith.constant 0 : index
    %35 = vector.load %arg6[%c0_17, %c0_18, %c0_19] : memref<1x1x96xf32, #tpu.memory_space<vmem>>, vector<1x1x96xf32>
    %36 = vector.shape_cast %35 : vector<1x1x96xf32> to vector<1x96xf32>
    %37 = vector.broadcast %36 : vector<1x96xf32> to vector<16x96xf32>
    %38 = arith.addf %34, %37 : vector<16x96xf32>
    %39 = vector.extract_strided_slice %38 {offsets = [0, 0], sizes = [16, 32], strides = [1, 1]} : vector<16x96xf32> to vector<16x32xf32>
    %40 = vector.shape_cast %39 : vector<16x32xf32> to vector<2x8x32xf32>
    %41 = vector.extract_strided_slice %40 {offsets = [0, 0, 0], sizes = [2, 8, 8], strides = [1, 1, 1]} : vector<2x8x32xf32> to vector<2x8x8xf32>
    %42 = vector.extract_strided_slice %40 {offsets = [0, 0, 8], sizes = [2, 8, 8], strides = [1, 1, 1]} : vector<2x8x32xf32> to vector<2x8x8xf32>
    %43 = vector.extract_strided_slice %40 {offsets = [0, 0, 16], sizes = [2, 8, 8], strides = [1, 1, 1]} : vector<2x8x32xf32> to vector<2x8x8xf32>
    %44 = vector.extract_strided_slice %40 {offsets = [0, 0, 24], sizes = [2, 8, 8], strides = [1, 1, 1]} : vector<2x8x32xf32> to vector<2x8x8xf32>
    %45 = tpu.concatenate %41, %42, %43, %44 in 0 : vector<2x8x8xf32>, vector<2x8x8xf32>, vector<2x8x8xf32>, vector<2x8x8xf32> -> vector<8x8x8xf32>
    %46 = arith.truncf %45 : vector<8x8x8xf32> to vector<8x8x8xbf16>
    %47 = vector.extract_strided_slice %38 {offsets = [0, 32], sizes = [16, 32], strides = [1, 1]} : vector<16x96xf32> to vector<16x32xf32>
    %48 = vector.shape_cast %47 : vector<16x32xf32> to vector<2x8x32xf32>
    %49 = vector.extract_strided_slice %48 {offsets = [0, 0, 0], sizes = [2, 8, 8], strides = [1, 1, 1]} : vector<2x8x32xf32> to vector<2x8x8xf32>
    %50 = vector.extract_strided_slice %48 {offsets = [0, 0, 8], sizes = [2, 8, 8], strides = [1, 1, 1]} : vector<2x8x32xf32> to vector<2x8x8xf32>
    %51 = vector.extract_strided_slice %48 {offsets = [0, 0, 16], sizes = [2, 8, 8], strides = [1, 1, 1]} : vector<2x8x32xf32> to vector<2x8x8xf32>
    %52 = vector.extract_strided_slice %48 {offsets = [0, 0, 24], sizes = [2, 8, 8], strides = [1, 1, 1]} : vector<2x8x32xf32> to vector<2x8x8xf32>
    %53 = tpu.concatenate %49, %50, %51, %52 in 0 : vector<2x8x8xf32>, vector<2x8x8xf32>, vector<2x8x8xf32>, vector<2x8x8xf32> -> vector<8x8x8xf32>
    %54 = arith.truncf %53 : vector<8x8x8xf32> to vector<8x8x8xbf16>
    %55 = vector.extract_strided_slice %38 {offsets = [0, 64], sizes = [16, 32], strides = [1, 1]} : vector<16x96xf32> to vector<16x32xf32>
    %56 = vector.shape_cast %55 : vector<16x32xf32> to vector<2x8x32xf32>
    %57 = vector.extract_strided_slice %56 {offsets = [0, 0, 0], sizes = [2, 8, 8], strides = [1, 1, 1]} : vector<2x8x32xf32> to vector<2x8x8xf32>
    %58 = vector.extract_strided_slice %56 {offsets = [0, 0, 8], sizes = [2, 8, 8], strides = [1, 1, 1]} : vector<2x8x32xf32> to vector<2x8x8xf32>
    %59 = vector.extract_strided_slice %56 {offsets = [0, 0, 16], sizes = [2, 8, 8], strides = [1, 1, 1]} : vector<2x8x32xf32> to vector<2x8x8xf32>
    %60 = vector.extract_strided_slice %56 {offsets = [0, 0, 24], sizes = [2, 8, 8], strides = [1, 1, 1]} : vector<2x8x32xf32> to vector<2x8x8xf32>
    %61 = tpu.concatenate %57, %58, %59, %60 in 0 : vector<2x8x8xf32>, vector<2x8x8xf32>, vector<2x8x8xf32>, vector<2x8x8xf32> -> vector<8x8x8xf32>
    %62 = arith.truncf %61 : vector<8x8x8xf32> to vector<8x8x8xbf16>
    "tpu.trace_start"() <{level = 10 : i32, message = "zqd,zkd->zqk"}> : () -> ()
    %cst_20 = arith.constant dense<0.000000e+00> : vector<8x8x8xf32>
    %63 = tpu.matmul %46, %54, %cst_20 {dimension_numbers = #tpu.dot_dimension_numbers<[2], [2], [1], [1], [0, 0, 0, 1, 1, 1], [0], [0]>} : vector<8x8x8xbf16>, vector<8x8x8xbf16>, vector<8x8x8xf32> -> vector<8x8x8xf32>
    "tpu.trace_stop"() : () -> ()
    %cst_21 = arith.constant 0.353553385 : f32
    %64 = vector.broadcast %cst_21 : f32 to vector<8x8x8xf32>
    %65 = arith.mulf %63, %64 : vector<8x8x8xf32>
    %66 = tpu.iota {dimensions = array<i32: 0>} : vector<8x8xi32>
    %67 = tpu.iota {dimensions = array<i32: 1>} : vector<8x8xi32>
    %68 = arith.cmpi sle, %67, %66 : vector<8x8xi32>
    %cst_22 = arith.constant -1.000000e+30 : f32
    %69 = vector.shape_cast %68 : vector<8x8xi1> to vector<1x8x8xi1>
    %70 = vector.broadcast %69 : vector<1x8x8xi1> to vector<8x8x8xi1>
    %71 = vector.broadcast %cst_22 : f32 to vector<8x8x8xf32>
    %72 = arith.select %70, %65, %71 : vector<8x8x8xi1>, vector<8x8x8xf32>
    %cst_23 = arith.constant dense<0xFF800000> : vector<8x8xf32>
    %73 = vector.multi_reduction <maximumf>, %72, %cst_23 [2] : vector<8x8x8xf32> to vector<8x8xf32>
    %74 = vector.shape_cast %73 : vector<8x8xf32> to vector<8x8x1xf32>
    %75 = vector.broadcast %74 : vector<8x8x1xf32> to vector<8x8x8xf32>
    %76 = arith.subf %72, %75 : vector<8x8x8xf32>
    %77 = math.exp %76 : vector<8x8x8xf32>
    %cst_24 = arith.constant dense<0.000000e+00> : vector<8x8xf32>
    %78 = vector.multi_reduction <add>, %77, %cst_24 [2] : vector<8x8x8xf32> to vector<8x8xf32>
    %79 = vector.shape_cast %78 : vector<8x8xf32> to vector<8x8x1xf32>
    %80 = tpu.reciprocal %79 {approx = true} : vector<8x8x1xf32> -> vector<8x8x1xf32>
    %81 = arith.truncf %77 : vector<8x8x8xf32> to vector<8x8x8xbf16>
    "tpu.trace_start"() <{level = 10 : i32, message = "zqk,zkd->zqd"}> : () -> ()
    %cst_25 = arith.constant dense<0.000000e+00> : vector<8x8x8xf32>
    %82 = tpu.matmul %81, %62, %cst_25 {dimension_numbers = #tpu.dot_dimension_numbers<[2], [1], [1], [2], [0, 0, 0, 1, 1, 2], [0], [0]>} : vector<8x8x8xbf16>, vector<8x8x8xbf16>, vector<8x8x8xf32> -> vector<8x8x8xf32>
    "tpu.trace_stop"() : () -> ()
    %83 = vector.broadcast %80 : vector<8x8x1xf32> to vector<8x8x8xf32>
    %84 = arith.mulf %82, %83 : vector<8x8x8xf32>
    %85 = vector.extract_strided_slice %84 {offsets = [0, 0, 0], sizes = [2, 8, 8], strides = [1, 1, 1]} : vector<8x8x8xf32> to vector<2x8x8xf32>
    %86 = vector.extract_strided_slice %84 {offsets = [2, 0, 0], sizes = [2, 8, 8], strides = [1, 1, 1]} : vector<8x8x8xf32> to vector<2x8x8xf32>
    %87 = vector.extract_strided_slice %84 {offsets = [4, 0, 0], sizes = [2, 8, 8], strides = [1, 1, 1]} : vector<8x8x8xf32> to vector<2x8x8xf32>
    %88 = vector.extract_strided_slice %84 {offsets = [6, 0, 0], sizes = [2, 8, 8], strides = [1, 1, 1]} : vector<8x8x8xf32> to vector<2x8x8xf32>
    %89 = tpu.concatenate %85, %86, %87, %88 in 2 : vector<2x8x8xf32>, vector<2x8x8xf32>, vector<2x8x8xf32>, vector<2x8x8xf32> -> vector<2x8x32xf32>
    %90 = vector.shape_cast %89 : vector<2x8x32xf32> to vector<16x32xf32>
    %91 = arith.truncf %90 : vector<16x32xf32> to vector<16x32xbf16>
    %c0_26 = arith.constant 0 : index
    %c0_27 = arith.constant 0 : index
    %c0_28 = arith.constant 0 : index
    %92 = vector.load %arg7[%c0_26, %c0_27, %c0_28] : memref<1x32x32xbf16, #tpu.memory_space<vmem>>, vector<1x32x32xbf16>
    %93 = vector.shape_cast %92 : vector<1x32x32xbf16> to vector<32x32xbf16>
    %cst_29 = arith.constant dense<0.000000e+00> : vector<16x32xf32>
    %94 = tpu.matmul %91, %93, %cst_29 {dimension_numbers = #tpu.dot_dimension_numbers<[1], [0], [0], [1], [0, 0, 1, 1], [], []>} : vector<16x32xbf16>, vector<32x32xbf16>, vector<16x32xf32> -> vector<16x32xf32>
    %c0_30 = arith.constant 0 : index
    %c0_31 = arith.constant 0 : index
    %c0_32 = arith.constant 0 : index
    %95 = vector.load %arg8[%c0_30, %c0_31, %c0_32] : memref<1x1x32xf32, #tpu.memory_space<vmem>>, vector<1x1x32xf32>
    %96 = vector.shape_cast %95 : vector<1x1x32xf32> to vector<1x32xf32>
    %97 = vector.broadcast %96 : vector<1x32xf32> to vector<16x32xf32>
    %98 = arith.addf %94, %97 : vector<16x32xf32>
    %99 = arith.addf %4, %98 : vector<16x32xf32>
    %cst_33 = arith.constant dense<0.000000e+00> : vector<16xf32>
    %100 = vector.multi_reduction <add>, %99, %cst_33 [1] : vector<16x32xf32> to vector<16xf32>
    %101 = vector.shape_cast %100 : vector<16xf32> to vector<16x1xf32>
    %cst_34 = arith.constant 3.200000e+01 : f32
    %102 = vector.broadcast %cst_34 : f32 to vector<16x1xf32>
    %103 = arith.divf %101, %102 : vector<16x1xf32>
    %104 = vector.broadcast %103 : vector<16x1xf32> to vector<16x32xf32>
    %105 = arith.subf %99, %104 : vector<16x32xf32>
    %106 = arith.mulf %105, %105 : vector<16x32xf32>
    %cst_35 = arith.constant dense<0.000000e+00> : vector<16xf32>
    %107 = vector.multi_reduction <add>, %106, %cst_35 [1] : vector<16x32xf32> to vector<16xf32>
    %108 = vector.shape_cast %107 : vector<16xf32> to vector<16x1xf32>
    %cst_36 = arith.constant 3.200000e+01 : f32
    %109 = vector.broadcast %cst_36 : f32 to vector<16x1xf32>
    %110 = arith.divf %108, %109 : vector<16x1xf32>
    %111 = vector.broadcast %103 : vector<16x1xf32> to vector<16x32xf32>
    %112 = arith.subf %99, %111 : vector<16x32xf32>
    %cst_37 = arith.constant 9.99999974E-6 : f32
    %113 = vector.broadcast %cst_37 : f32 to vector<16x1xf32>
    %114 = arith.addf %110, %113 : vector<16x1xf32>
    %115 = math.rsqrt %114 : vector<16x1xf32>
    %116 = vector.broadcast %115 : vector<16x1xf32> to vector<16x32xf32>
    %117 = arith.mulf %112, %116 : vector<16x32xf32>
    %c0_38 = arith.constant 0 : index
    %c0_39 = arith.constant 0 : index
    %c0_40 = arith.constant 0 : index
    %118 = vector.load %arg9[%c0_38, %c0_39, %c0_40] : memref<1x1x32xf32, #tpu.memory_space<vmem>>, vector<1x1x32xf32>
    %119 = vector.shape_cast %118 : vector<1x1x32xf32> to vector<1x32xf32>
    %120 = vector.broadcast %119 : vector<1x32xf32> to vector<16x32xf32>
    %121 = arith.mulf %117, %120 : vector<16x32xf32>
    %c0_41 = arith.constant 0 : index
    %c0_42 = arith.constant 0 : index
    %c0_43 = arith.constant 0 : index
    %122 = vector.load %arg10[%c0_41, %c0_42, %c0_43] : memref<1x1x32xf32, #tpu.memory_space<vmem>>, vector<1x1x32xf32>
    %123 = vector.shape_cast %122 : vector<1x1x32xf32> to vector<1x32xf32>
    %124 = vector.broadcast %123 : vector<1x32xf32> to vector<16x32xf32>
    %125 = arith.addf %121, %124 : vector<16x32xf32>
    %126 = arith.truncf %125 : vector<16x32xf32> to vector<16x32xbf16>
    %c0_44 = arith.constant 0 : index
    %c0_45 = arith.constant 0 : index
    %c0_46 = arith.constant 0 : index
    %127 = vector.load %arg11[%c0_44, %c0_45, %c0_46] : memref<1x32x128xbf16, #tpu.memory_space<vmem>>, vector<1x32x128xbf16>
    %128 = vector.shape_cast %127 : vector<1x32x128xbf16> to vector<32x128xbf16>
    %cst_47 = arith.constant dense<0.000000e+00> : vector<16x128xf32>
    %129 = tpu.matmul %126, %128, %cst_47 {dimension_numbers = #tpu.dot_dimension_numbers<[1], [0], [0], [1], [0, 0, 1, 1], [], []>} : vector<16x32xbf16>, vector<32x128xbf16>, vector<16x128xf32> -> vector<16x128xf32>
    %c0_48 = arith.constant 0 : index
    %c0_49 = arith.constant 0 : index
    %c0_50 = arith.constant 0 : index
    %130 = vector.load %arg12[%c0_48, %c0_49, %c0_50] : memref<1x1x128xf32, #tpu.memory_space<vmem>>, vector<1x1x128xf32>
    %131 = vector.shape_cast %130 : vector<1x1x128xf32> to vector<1x128xf32>
    %132 = vector.broadcast %131 : vector<1x128xf32> to vector<16x128xf32>
    %133 = arith.addf %129, %132 : vector<16x128xf32>
    %cst_51 = arith.constant 1.702000e+00 : f32
    %134 = vector.broadcast %cst_51 : f32 to vector<16x128xf32>
    %135 = arith.mulf %134, %133 : vector<16x128xf32>
    %136 = arith.negf %135 : vector<16x128xf32>
    %137 = math.exp %136 : vector<16x128xf32>
    %cst_52 = arith.constant 1.000000e+00 : f32
    %138 = vector.broadcast %cst_52 : f32 to vector<16x128xf32>
    %139 = arith.addf %138, %137 : vector<16x128xf32>
    %140 = arith.divf %138, %139 : vector<16x128xf32>
    %141 = arith.mulf %133, %140 : vector<16x128xf32>
    %142 = arith.truncf %141 : vector<16x128xf32> to vector<16x128xbf16>
    %c0_53 = arith.constant 0 : index
    %c0_54 = arith.constant 0 : index
    %c0_55 = arith.constant 0 : index
    %143 = vector.load %arg13[%c0_53, %c0_54, %c0_55] : memref<1x128x32xbf16, #tpu.memory_space<vmem>>, vector<1x128x32xbf16>
    %144 = vector.shape_cast %143 : vector<1x128x32xbf16> to vector<128x32xbf16>
    %cst_56 = arith.constant dense<0.000000e+00> : vector<16x32xf32>
    %145 = tpu.matmul %142, %144, %cst_56 {dimension_numbers = #tpu.dot_dimension_numbers<[1], [0], [0], [1], [0, 0, 1, 1], [], []>} : vector<16x128xbf16>, vector<128x32xbf16>, vector<16x32xf32> -> vector<16x32xf32>
    %c0_57 = arith.constant 0 : index
    %c0_58 = arith.constant 0 : index
    %c0_59 = arith.constant 0 : index
    %146 = vector.load %arg14[%c0_57, %c0_58, %c0_59] : memref<1x1x32xf32, #tpu.memory_space<vmem>>, vector<1x1x32xf32>
    %147 = vector.shape_cast %146 : vector<1x1x32xf32> to vector<1x32xf32>
    %148 = vector.broadcast %147 : vector<1x32xf32> to vector<16x32xf32>
    %149 = arith.addf %145, %148 : vector<16x32xf32>
    %150 = arith.addf %99, %149 : vector<16x32xf32>
    %151 = vector.shape_cast %150 : vector<16x32xf32> to vector<2x8x32xf32>
    %c0_60 = arith.constant 0 : index
    %c0_61 = arith.constant 0 : index
    %c0_62 = arith.constant 0 : index
    %152 = vector.load %arg15[%c0_60, %c0_61, %c0_62] : memref<2x8x32xf32, #tpu.memory_space<vmem>>, vector<2x8x32xf32>
    tpu.vector_store %arg15[%c0_60, %c0_61, %c0_62], %151 {strides = array<i32>} : memref<2x8x32xf32, #tpu.memory_space<vmem>>, vector<2x8x32xf32>,
    return
  }
  func.func @transform_0(%arg0: i32, %arg1: i32) -> (i32, i32, i32) {
    %c0_i32 = arith.constant 0 : i32
    %c0_i32_0 = arith.constant 0 : i32
    %c0_i32_1 = arith.constant 0 : i32
    return %arg0, %c0_i32, %c0_i32_0 : i32, i32, i32
  }
  func.func @transform_1(%arg0: i32, %arg1: i32) -> (i32, i32, i32) {
    %c0_i32 = arith.constant 0 : i32
    %c0_i32_0 = arith.constant 0 : i32
    %c0_i32_1 = arith.constant 0 : i32
    return %arg1, %c0_i32, %c0_i32_0 : i32, i32, i32
  }
  func.func @transform_2(%arg0: i32, %arg1: i32) -> (i32, i32, i32) {
    %c0_i32 = arith.constant 0 : i32
    %c0_i32_0 = arith.constant 0 : i32
    %c0_i32_1 = arith.constant 0 : i32
    return %arg1, %c0_i32, %c0_i32_0 : i32, i32, i32
  }
  func.func @transform_3(%arg0: i32, %arg1: i32) -> (i32, i32, i32) {
    %c0_i32 = arith.constant 0 : i32
    %c0_i32_0 = arith.constant 0 : i32
    %c0_i32_1 = arith.constant 0 : i32
    return %arg1, %c0_i32, %c0_i32_0 : i32, i32, i32
  }
  func.func @transform_4(%arg0: i32, %arg1: i32) -> (i32, i32, i32) {
    %c0_i32 = arith.constant 0 : i32
    %c0_i32_0 = arith.constant 0 : i32
    %c0_i32_1 = arith.constant 0 : i32
    return %arg1, %c0_i32, %c0_i32_0 : i32, i32, i32
  }
  func.func @transform_5(%arg0: i32, %arg1: i32) -> (i32, i32, i32) {
    %c0_i32 = arith.constant 0 : i32
    %c0_i32_0 = arith.constant 0 : i32
    %c0_i32_1 = arith.constant 0 : i32
    return %arg1, %c0_i32, %c0_i32_0 : i32, i32, i32
  }
  func.func @transform_6(%arg0: i32, %arg1: i32) -> (i32, i32, i32) {
    %c0_i32 = arith.constant 0 : i32
    %c0_i32_0 = arith.constant 0 : i32
    %c0_i32_1 = arith.constant 0 : i32
    return %arg1, %c0_i32, %c0_i32_0 : i32, i32, i32
  }
  func.func @transform_7(%arg0: i32, %arg1: i32) -> (i32, i32, i32) {
    %c0_i32 = arith.constant 0 : i32
    %c0_i32_0 = arith.constant 0 : i32
    %c0_i32_1 = arith.constant 0 : i32
    return %arg1, %c0_i32, %c0_i32_0 : i32, i32, i32
  }
  func.func @transform_8(%arg0: i32, %arg1: i32) -> (i32, i32, i32) {
    %c0_i32 = arith.constant 0 : i32
    %c0_i32_0 = arith.constant 0 : i32
    %c0_i32_1 = arith.constant 0 : i32
    return %arg1, %c0_i32, %c0_i32_0 : i32, i32, i32
  }
  func.func @transform_9(%arg0: i32, %arg1: i32) -> (i32, i32, i32) {
    %c0_i32 = arith.constant 0 : i32
    %c0_i32_0 = arith.constant 0 : i32
    %c0_i32_1 = arith.constant 0 : i32
    return %arg1, %c0_i32, %c0_i32_0 : i32, i32, i32
  }
  func.func @transform_10(%arg0: i32, %arg1: i32) -> (i32, i32, i32) {
    %c0_i32 = arith.constant 0 : i32
    %c0_i32_0 = arith.constant 0 : i32
    %c0_i32_1 = arith.constant 0 : i32
    return %arg1, %c0_i32, %c0_i32_0 : i32, i32, i32
  }
  func.func @transform_11(%arg0: i32, %arg1: i32) -> (i32, i32, i32) {
    %c0_i32 = arith.constant 0 : i32
    %c0_i32_0 = arith.constant 0 : i32
    %c0_i32_1 = arith.constant 0 : i32
    return %arg1, %c0_i32, %c0_i32_0 : i32, i32, i32
  }
  func.func @transform_12(%arg0: i32, %arg1: i32) -> (i32, i32, i32) {
    %c0_i32 = arith.constant 0 : i32
    %c0_i32_0 = arith.constant 0 : i32
    %c0_i32_1 = arith.constant 0 : i32
    return %arg1, %c0_i32, %c0_i32_0 : i32, i32, i32
  }
  func.func @transform_13(%arg0: i32, %arg1: i32) -> (i32, i32, i32) {
    %c0_i32 = arith.constant 0 : i32
    %c0_i32_0 = arith.constant 0 : i32
    %c0_i32_1 = arith.constant 0 : i32
    return %arg0, %c0_i32, %c0_i32_0 : i32, i32, i32
  }
}

</mosaic_0001>

<llo_original>
// kernel: tpu_custom_call.1
$region0: #{tpu_custom_call.1}
  #allocation0 [shape = 'u32[]', space=smem, size = 0x4, offset = 0x4, fixed_abs, tag = 'smem constant byte address 0x4 - core index']
  #allocation1 [shape = 'u32[72,128]{1,0:T(1,128)}', space=vmem, size = 0x9000, scoped, tag = 'internal scratch']
  %s0 = inlined_call_operand.vmem [shape: f32[2,8,32], index: 0, kind: input, shape index: {}]
  %s1 = inlined_call_operand.vmem [shape: f32[2,1,32], index: 1, kind: input, shape index: {}]
  %s2 = inlined_call_operand.vmem [shape: f32[2,1,32], index: 2, kind: input, shape index: {}]
  %s3 = inlined_call_operand.vmem [shape: bf16[2,32,96], index: 3, kind: input, shape index: {}]
  %s4 = inlined_call_operand.vmem [shape: f32[2,1,96], index: 4, kind: input, shape index: {}]
  %s5 = inlined_call_operand.vmem [shape: bf16[2,32,32], index: 5, kind: input, shape index: {}]
  %s6 = inlined_call_operand.vmem [shape: f32[2,1,32], index: 6, kind: input, shape index: {}]
  %s7 = inlined_call_operand.vmem [shape: f32[2,1,32], index: 7, kind: input, shape index: {}]
  %s8 = inlined_call_operand.vmem [shape: f32[2,1,32], index: 8, kind: input, shape index: {}]
  %s9 = inlined_call_operand.vmem [shape: bf16[2,32,128], index: 9, kind: input, shape index: {}]
  %s10 = inlined_call_operand.vmem [shape: f32[2,1,128], index: 10, kind: input, shape index: {}]
  %s11 = inlined_call_operand.vmem [shape: bf16[2,128,32], index: 11, kind: input, shape index: {}]
  %s12 = inlined_call_operand.vmem [shape: f32[2,1,32], index: 12, kind: input, shape index: {}]
  %s13 = inlined_call_operand.hbm [shape: f32[2,8,32], index: 13, kind: output, shape index: {}]
  %s14 = sld [smem:[#allocation0]]
  $region89: #{tpu_custom_call.1} parent=0
    _
  %s16 = ssub.s32 1, %s14
  %s17 = scalar_select 0, %s16, %s14
  $region1: #{tpu_custom_call.1} parent=0
    #allocation2 [shape = 'u8[8192]{0}', space=vmem, size = 0x2000, scoped, tag = 'output window, operand 0, single buffered']
    #allocation3 [shape = 's32[2]{0}', space=sflag, size = 0x8, scoped, tag = 'scoped memory for tpu_custom_call.1']
    %18 = vsyncpa [#allocation3], 0
    loop: start=0, step=1, limit=4
    $region2: #{tpu_custom_call.1} parent=1 // loop_pre_header
      _
    $region3: #{tpu_custom_call.1} parent=1 // loop_header
      %s20 = sphi 0, %s24
      %p21 = scmp.ge.s32.totalorder %s20, 4
      %s27 = sphi 0, %s39
      %s28 = sphi 0, %s35
      %s29 = sphi 0, %s27
      %s30 = sphi 0, %s28
      %s31 = sphi 0, %s29
      %s32 = sphi 0, %s30
      %s42 = sphi 0, %s44
      %s45 = sphi 0, %s42
      %s46 = sphi 0, %s45
      %s62 = sphi 0, %s46
      %s68 = sphi 0, %s70
      %s71 = sphi 0, %s68
      %s72 = sphi 0, %s71
      %s88 = sphi 0, %s72
      %s94 = sphi 0, %s96
      %s97 = sphi 0, %s94
      %s98 = sphi 0, %s97
      %s114 = sphi 0, %s98
      %s120 = sphi 0, %s122
      %s123 = sphi 0, %s120
      %s124 = sphi 0, %s123
      %s140 = sphi 0, %s124
      %s146 = sphi 0, %s148
      %s149 = sphi 0, %s146
      %s150 = sphi 0, %s149
      %s166 = sphi 0, %s150
      %s172 = sphi 0, %s174
      %s175 = sphi 0, %s172
      %s176 = sphi 0, %s175
      %s192 = sphi 0, %s176
      %s198 = sphi 0, %s200
      %s201 = sphi 0, %s198
      %s202 = sphi 0, %s201
      %s218 = sphi 0, %s202
      %s224 = sphi 0, %s226
      %s227 = sphi 0, %s224
      %s228 = sphi 0, %s227
      %s244 = sphi 0, %s228
      %s250 = sphi 0, %s252
      %s253 = sphi 0, %s250
      %s254 = sphi 0, %s253
      %s270 = sphi 0, %s254
      %s276 = sphi 0, %s278
      %s279 = sphi 0, %s276
      %s280 = sphi 0, %s279
      %s296 = sphi 0, %s280
      %s302 = sphi 0, %s304
      %s305 = sphi 0, %s302
      %s306 = sphi 0, %s305
      %s322 = sphi 0, %s306
      %s328 = sphi 0, %s330
      %s331 = sphi 0, %s328
      %s332 = sphi 0, %s331
      %s348 = sphi 0, %s332
      %s354 = sphi 0, %s356
      %s357 = sphi 0, %s354
      %s358 = sphi 0, %s357
      %s374 = sphi 0, %s358
      %s380 = sphi 0, %s382
      %s383 = sphi 0, %s380
      %s384 = sphi 0, %s383
      %s400 = sphi 0, %s384
    $region4: #{tpu_custom_call.1} parent=1 // loop_header_branch
      %23 = sbr.rel (%p21) target = $region8
    $region5: #{tpu_custom_call.1} parent=1 // loop_body
      %s25 = ssub.s32 %s20, 1
      %s26 = ssub.s32 %s20, 2
      %s33 = sadd.s32 1, %s28
      %p34 = scmp.ge.s32.totalorder %s33, 2
      %s35 = scalar_select %p34, 0, %s33
      %s36 = sadd.s32 1, %s27
      %s37 = scalar_select %p34, %s36, %s27
      %p38 = scmp.ge.s32.totalorder %s37, 1
      %s39 = scalar_select %p38, 0, %s37
      %s40 = ssub.s32 %s27, %s39
      %p41 = scmp.eq.s32.totalorder %s40, 0
      %s43 = sadd.s32 %s42, 1
      %s44 = scalar_select %p41, %s42, %s43
      %p47 = pneg %p41
      %p48 = scmp.eq.s32.totalorder %s20, 1
      %p49 = por %p47, %p48
      %p50 = scmp.ne.s32.totalorder %s42, %s45
      %p51 = scmp.eq.s32.totalorder %s20, 0
      %p52 = por %p50, %p51
      %p53 = scmp.ne.s32.totalorder %s42, %s45
      %p54 = scmp.eq.s32.totalorder %s25, 1
      %p55 = por %p53, %p54
      %p56 = scmp.ne.s32.totalorder %s45, %s46
      %p57 = scmp.eq.s32.totalorder %s25, 0
      %p58 = por %p56, %p57
      %p59 = scmp.ne.s32.totalorder %s45, %s46
      %p60 = scmp.eq.s32.totalorder %s26, 1
      %p61 = por %p59, %p60
      %p63 = scmp.ne.s32.totalorder %s46, %s62
      %p64 = scmp.eq.s32.totalorder %s26, 0
      %p65 = por %p63, %p64
      %s66 = ssub.s32 %s28, %s35
      %p67 = scmp.eq.s32.totalorder %s66, 0
      %s69 = sadd.s32 %s68, 1
      %s70 = scalar_select %p67, %s68, %s69
      %p73 = pneg %p67
      %p74 = scmp.eq.s32.totalorder %s20, 1
      %p75 = por %p73, %p74
      %p76 = scmp.ne.s32.totalorder %s68, %s71
      %p77 = scmp.eq.s32.totalorder %s20, 0
      %p78 = por %p76, %p77
      %p79 = scmp.ne.s32.totalorder %s68, %s71
      %p80 = scmp.eq.s32.totalorder %s25, 1
      %p81 = por %p79, %p80
      %p82 = scmp.ne.s32.totalorder %s71, %s72
      %p83 = scmp.eq.s32.totalorder %s25, 0
      %p84 = por %p82, %p83
      %p85 = scmp.ne.s32.totalorder %s71, %s72
      %p86 = scmp.eq.s32.totalorder %s26, 1
      %p87 = por %p85, %p86
      %p89 = scmp.ne.s32.totalorder %s72, %s88
      %p90 = scmp.eq.s32.totalorder %s26, 0
      %p91 = por %p89, %p90
      %s92 = ssub.s32 %s28, %s35
      %p93 = scmp.eq.s32.totalorder %s92, 0
      %s95 = sadd.s32 %s94, 1
      %s96 = scalar_select %p93, %s94, %s95
      %p99 = pneg %p93
      %p100 = scmp.eq.s32.totalorder %s20, 1
      %p101 = por %p99, %p100
      %p102 = scmp.ne.s32.totalorder %s94, %s97
      %p103 = scmp.eq.s32.totalorder %s20, 0
      %p104 = por %p102, %p103
      %p105 = scmp.ne.s32.totalorder %s94, %s97
      %p106 = scmp.eq.s32.totalorder %s25, 1
      %p107 = por %p105, %p106
      %p108 = scmp.ne.s32.totalorder %s97, %s98
      %p109 = scmp.eq.s32.totalorder %s25, 0
      %p110 = por %p108, %p109
      %p111 = scmp.ne.s32.totalorder %s97, %s98
      %p112 = scmp.eq.s32.totalorder %s26, 1
      %p113 = por %p111, %p112
      %p115 = scmp.ne.s32.totalorder %s98, %s114
      %p116 = scmp.eq.s32.totalorder %s26, 0
      %p117 = por %p115, %p116
      %s118 = ssub.s32 %s28, %s35
      %p119 = scmp.eq.s32.totalorder %s118, 0
      %s121 = sadd.s32 %s120, 1
      %s122 = scalar_select %p119, %s120, %s121
      %p125 = pneg %p119
      %p126 = scmp.eq.s32.totalorder %s20, 1
      %p127 = por %p125, %p126
      %p128 = scmp.ne.s32.totalorder %s120, %s123
      %p129 = scmp.eq.s32.totalorder %s20, 0
      %p130 = por %p128, %p129
      %p131 = scmp.ne.s32.totalorder %s120, %s123
      %p132 = scmp.eq.s32.totalorder %s25, 1
      %p133 = por %p131, %p132
      %p134 = scmp.ne.s32.totalorder %s123, %s124
      %p135 = scmp.eq.s32.totalorder %s25, 0
      %p136 = por %p134, %p135
      %p137 = scmp.ne.s32.totalorder %s123, %s124
      %p138 = scmp.eq.s32.totalorder %s26, 1
      %p139 = por %p137, %p138
      %p141 = scmp.ne.s32.totalorder %s124, %s140
      %p142 = scmp.eq.s32.totalorder %s26, 0
      %p143 = por %p141, %p142
      %s144 = ssub.s32 %s28, %s35
      %p145 = scmp.eq.s32.totalorder %s144, 0
      %s147 = sadd.s32 %s146, 1
      %s148 = scalar_select %p145, %s146, %s147
      %p151 = pneg %p145
      %p152 = scmp.eq.s32.totalorder %s20, 1
      %p153 = por %p151, %p152
      %p154 = scmp.ne.s32.totalorder %s146, %s149
      %p155 = scmp.eq.s32.totalorder %s20, 0
      %p156 = por %p154, %p155
      %p157 = scmp.ne.s32.totalorder %s146, %s149
      %p158 = scmp.eq.s32.totalorder %s25, 1
      %p159 = por %p157, %p158
      %p160 = scmp.ne.s32.totalorder %s149, %s150
      %p161 = scmp.eq.s32.totalorder %s25, 0
      %p162 = por %p160, %p161
      %p163 = scmp.ne.s32.totalorder %s149, %s150
      %p164 = scmp.eq.s32.totalorder %s26, 1
      %p165 = por %p163, %p164
      %p167 = scmp.ne.s32.totalorder %s150, %s166
      %p168 = scmp.eq.s32.totalorder %s26, 0
      %p169 = por %p167, %p168
      %s170 = ssub.s32 %s28, %s35
      %p171 = scmp.eq.s32.totalorder %s170, 0
      %s173 = sadd.s32 %s172, 1
      %s174 = scalar_select %p171, %s172, %s173
      %p177 = pneg %p171
      %p178 = scmp.eq.s32.totalorder %s20, 1
      %p179 = por %p177, %p178
      %p180 = scmp.ne.s32.totalorder %s172, %s175
      %p181 = scmp.eq.s32.totalorder %s20, 0
      %p182 = por %p180, %p181
      %p183 = scmp.ne.s32.totalorder %s172, %s175
      %p184 = scmp.eq.s32.totalorder %s25, 1
      %p185 = por %p183, %p184
      %p186 = scmp.ne.s32.totalorder %s175, %s176
      %p187 = scmp.eq.s32.totalorder %s25, 0
      %p188 = por %p186, %p187
      %p189 = scmp.ne.s32.totalorder %s175, %s176
      %p190 = scmp.eq.s32.totalorder %s26, 1
      %p191 = por %p189, %p190
      %p193 = scmp.ne.s32.totalorder %s176, %s192
      %p194 = scmp.eq.s32.totalorder %s26, 0
      %p195 = por %p193, %p194
      %s196 = ssub.s32 %s28, %s35
      %p197 = scmp.eq.s32.totalorder %s196, 0
      %s199 = sadd.s32 %s198, 1
      %s200 = scalar_select %p197, %s198, %s199
      %p203 = pneg %p197
      %p204 = scmp.eq.s32.totalorder %s20, 1
      %p205 = por %p203, %p204
      %p206 = scmp.ne.s32.totalorder %s198, %s201
      %p207 = scmp.eq.s32.totalorder %s20, 0
      %p208 = por %p206, %p207
      %p209 = scmp.ne.s32.totalorder %s198, %s201
      %p210 = scmp.eq.s32.totalorder %s25, 1
      %p211 = por %p209, %p210
      %p212 = scmp.ne.s32.totalorder %s201, %s202
      %p213 = scmp.eq.s32.totalorder %s25, 0
      %p214 = por %p212, %p213
      %p215 = scmp.ne.s32.totalorder %s201, %s202
      %p216 = scmp.eq.s32.totalorder %s26, 1
      %p217 = por %p215, %p216
      %p219 = scmp.ne.s32.totalorder %s202, %s218
      %p220 = scmp.eq.s32.totalorder %s26, 0
      %p221 = por %p219, %p220
      %s222 = ssub.s32 %s28, %s35
      %p223 = scmp.eq.s32.totalorder %s222, 0
      %s225 = sadd.s32 %s224, 1
      %s226 = scalar_select %p223, %s224, %s225
      %p229 = pneg %p223
      %p230 = scmp.eq.s32.totalorder %s20, 1
      %p231 = por %p229, %p230
      %p232 = scmp.ne.s32.totalorder %s224, %s227
      %p233 = scmp.eq.s32.totalorder %s20, 0
      %p234 = por %p232, %p233
      %p235 = scmp.ne.s32.totalorder %s224, %s227
      %p236 = scmp.eq.s32.totalorder %s25, 1
      %p237 = por %p235, %p236
      %p238 = scmp.ne.s32.totalorder %s227, %s228
      %p239 = scmp.eq.s32.totalorder %s25, 0
      %p240 = por %p238, %p239
      %p241 = scmp.ne.s32.totalorder %s227, %s228
      %p242 = scmp.eq.s32.totalorder %s26, 1
      %p243 = por %p241, %p242
      %p245 = scmp.ne.s32.totalorder %s228, %s244
      %p246 = scmp.eq.s32.totalorder %s26, 0
      %p247 = por %p245, %p246
      %s248 = ssub.s32 %s28, %s35
      %p249 = scmp.eq.s32.totalorder %s248, 0
      %s251 = sadd.s32 %s250, 1
      %s252 = scalar_select %p249, %s250, %s251
      %p255 = pneg %p249
      %p256 = scmp.eq.s32.totalorder %s20, 1
      %p257 = por %p255, %p256
      %p258 = scmp.ne.s32.totalorder %s250, %s253
      %p259 = scmp.eq.s32.totalorder %s20, 0
      %p260 = por %p258, %p259
      %p261 = scmp.ne.s32.totalorder %s250, %s253
      %p262 = scmp.eq.s32.totalorder %s25, 1
      %p263 = por %p261, %p262
      %p264 = scmp.ne.s32.totalorder %s253, %s254
      %p265 = scmp.eq.s32.totalorder %s25, 0
      %p266 = por %p264, %p265
      %p267 = scmp.ne.s32.totalorder %s253, %s254
      %p268 = scmp.eq.s32.totalorder %s26, 1
      %p269 = por %p267, %p268
      %p271 = scmp.ne.s32.totalorder %s254, %s270
      %p272 = scmp.eq.s32.totalorder %s26, 0
      %p273 = por %p271, %p272
      %s274 = ssub.s32 %s28, %s35
      %p275 = scmp.eq.s32.totalorder %s274, 0
      %s277 = sadd.s32 %s276, 1
      %s278 = scalar_select %p275, %s276, %s277
      %p281 = pneg %p275
      %p282 = scmp.eq.s32.totalorder %s20, 1
      %p283 = por %p281, %p282
      %p284 = scmp.ne.s32.totalorder %s276, %s279
      %p285 = scmp.eq.s32.totalorder %s20, 0
      %p286 = por %p284, %p285
      %p287 = scmp.ne.s32.totalorder %s276, %s279
      %p288 = scmp.eq.s32.totalorder %s25, 1
      %p289 = por %p287, %p288
      %p290 = scmp.ne.s32.totalorder %s279, %s280
      %p291 = scmp.eq.s32.totalorder %s25, 0
      %p292 = por %p290, %p291
      %p293 = scmp.ne.s32.totalorder %s279, %s280
      %p294 = scmp.eq.s32.totalorder %s26, 1
      %p295 = por %p293, %p294
      %p297 = scmp.ne.s32.totalorder %s280, %s296
      %p298 = scmp.eq.s32.totalorder %s26, 0
      %p299 = por %p297, %p298
      %s300 = ssub.s32 %s28, %s35
      %p301 = scmp.eq.s32.totalorder %s300, 0
      %s303 = sadd.s32 %s302, 1
      %s304 = scalar_select %p301, %s302, %s303
      %p307 = pneg %p301
      %p308 = scmp.eq.s32.totalorder %s20, 1
      %p309 = por %p307, %p308
      %p310 = scmp.ne.s32.totalorder %s302, %s305
      %p311 = scmp.eq.s32.totalorder %s20, 0
      %p312 = por %p310, %p311
      %p313 = scmp.ne.s32.totalorder %s302, %s305
      %p314 = scmp.eq.s32.totalorder %s25, 1
      %p315 = por %p313, %p314
      %p316 = scmp.ne.s32.totalorder %s305, %s306
      %p317 = scmp.eq.s32.totalorder %s25, 0
      %p318 = por %p316, %p317
      %p319 = scmp.ne.s32.totalorder %s305, %s306
      %p320 = scmp.eq.s32.totalorder %s26, 1
      %p321 = por %p319, %p320
      %p323 = scmp.ne.s32.totalorder %s306, %s322
      %p324 = scmp.eq.s32.totalorder %s26, 0
      %p325 = por %p323, %p324
      %s326 = ssub.s32 %s28, %s35
      %p327 = scmp.eq.s32.totalorder %s326, 0
      %s329 = sadd.s32 %s328, 1
      %s330 = scalar_select %p327, %s328, %s329
      %p333 = pneg %p327
      %p334 = scmp.eq.s32.totalorder %s20, 1
      %p335 = por %p333, %p334
      %p336 = scmp.ne.s32.totalorder %s328, %s331
      %p337 = scmp.eq.s32.totalorder %s20, 0
      %p338 = por %p336, %p337
      %p339 = scmp.ne.s32.totalorder %s328, %s331
      %p340 = scmp.eq.s32.totalorder %s25, 1
      %p341 = por %p339, %p340
      %p342 = scmp.ne.s32.totalorder %s331, %s332
      %p343 = scmp.eq.s32.totalorder %s25, 0
      %p344 = por %p342, %p343
      %p345 = scmp.ne.s32.totalorder %s331, %s332
      %p346 = scmp.eq.s32.totalorder %s26, 1
      %p347 = por %p345, %p346
      %p349 = scmp.ne.s32.totalorder %s332, %s348
      %p350 = scmp.eq.s32.totalorder %s26, 0
      %p351 = por %p349, %p350
      %s352 = ssub.s32 %s28, %s35
      %p353 = scmp.eq.s32.totalorder %s352, 0
      %s355 = sadd.s32 %s354, 1
      %s356 = scalar_select %p353, %s354, %s355
      %p359 = pneg %p353
      %p360 = scmp.eq.s32.totalorder %s20, 1
      %p361 = por %p359, %p360
      %p362 = scmp.ne.s32.totalorder %s354, %s357
      %p363 = scmp.eq.s32.totalorder %s20, 0
      %p364 = por %p362, %p363
      %p365 = scmp.ne.s32.totalorder %s354, %s357
      %p366 = scmp.eq.s32.totalorder %s25, 1
      %p367 = por %p365, %p366
      %p368 = scmp.ne.s32.totalorder %s357, %s358
      %p369 = scmp.eq.s32.totalorder %s25, 0
      %p370 = por %p368, %p369
      %p371 = scmp.ne.s32.totalorder %s357, %s358
      %p372 = scmp.eq.s32.totalorder %s26, 1
      %p373 = por %p371, %p372
      %p375 = scmp.ne.s32.totalorder %s358, %s374
      %p376 = scmp.eq.s32.totalorder %s26, 0
      %p377 = por %p375, %p376
      %s378 = ssub.s32 %s27, %s39
      %p379 = scmp.eq.s32.totalorder %s378, 0
      %s381 = sadd.s32 %s380, 1
      %s382 = scalar_select %p379, %s380, %s381
      %p385 = pneg %p379
      %p386 = scmp.eq.s32.totalorder %s20, 1
      %p387 = por %p385, %p386
      %p388 = scmp.ne.s32.totalorder %s380, %s383
      %p389 = scmp.eq.s32.totalorder %s20, 0
      %p390 = por %p388, %p389
      %p391 = scmp.ne.s32.totalorder %s380, %s383
      %p392 = scmp.eq.s32.totalorder %s25, 1
      %p393 = por %p391, %p392
      %p394 = scmp.ne.s32.totalorder %s383, %s384
      %p395 = scmp.eq.s32.totalorder %s25, 0
      %p396 = por %p394, %p395
      %p397 = scmp.ne.s32.totalorder %s383, %s384
      %p398 = scmp.eq.s32.totalorder %s26, 1
      %p399 = por %p397, %p398
      %p401 = scmp.ne.s32.totalorder %s384, %s400
      %p402 = scmp.eq.s32.totalorder %s26, 0
      %p403 = por %p401, %p402
      %p404 = scmp.le.s32.totalorder 1, %s20
      %p405 = scmp.lt.s32.totalorder %s20, 3
      %p406 = pnand %p404, %p405
      %p407 = pneg %p406
      // Predicated region
      $region9: #{tpu_custom_call.1} parent=5 // pred_check
        _
      $region10: #{tpu_custom_call.1} parent=5 // pred_check_branch
        %409 = sbr.rel (%p406) target = $region12
      $region11: #{tpu_custom_call.1} parent=5 // pred_region
        %s410 = ssub.s32 %s20, 1
        // Predicated region
        $region13: #{tpu_custom_call.1} parent=11 // pred_check
          %p411 = pneg %p58
        $region14: #{tpu_custom_call.1} parent=11 // pred_check_branch
          %413 = sbr.rel (%p411) target = $region16
        $region15: #{tpu_custom_call.1} parent=11 // pred_region
          %s414 = smul.u32 2, %s29
          %p415 = scmp.lt.s32.totalorder %s414, 1
          %s416 = scalar_select %p415, %s414, 1
          %s417 = smul.addr %s416, 8
          %s418 = scalar_lea.vmem %s0, %s417
          %s419 = smul.u32 2, %s29
        $region16: #{tpu_custom_call.1} parent=11 // pred_fallthru
          _
      $region12: #{tpu_custom_call.1} parent=5 // pred_fallthru
        _
      %p420 = scmp.lt.s32.totalorder %s20, 2
      // Predicated region
      $region17: #{tpu_custom_call.1} parent=5 // pred_check
        %p421 = pneg %p420
      $region18: #{tpu_custom_call.1} parent=5 // pred_check_branch
        %423 = sbr.rel (%p421) target = $region20
      $region19: #{tpu_custom_call.1} parent=5 // pred_region
        // Predicated region
        $region21: #{tpu_custom_call.1} parent=19 // pred_check
          %p424 = pneg %p78
        $region22: #{tpu_custom_call.1} parent=19 // pred_check_branch
          %426 = sbr.rel (%p424) target = $region24
        $region23: #{tpu_custom_call.1} parent=19 // pred_region
          %p427 = scmp.lt.s32.totalorder %s28, 1
          %s428 = scalar_select %p427, %s28, 1
          %s429 = scalar_lea.vmem %s1, %s428
        $region24: #{tpu_custom_call.1} parent=19 // pred_fallthru
          _
        // Predicated region
        $region25: #{tpu_custom_call.1} parent=19 // pred_check
          %p430 = pneg %p104
        $region26: #{tpu_custom_call.1} parent=19 // pred_check_branch
          %432 = sbr.rel (%p430) target = $region28
        $region27: #{tpu_custom_call.1} parent=19 // pred_region
          %p433 = scmp.lt.s32.totalorder %s28, 1
          %s434 = scalar_select %p433, %s28, 1
          %s435 = scalar_lea.vmem %s2, %s434
        $region28: #{tpu_custom_call.1} parent=19 // pred_fallthru
          _
        // Predicated region
        $region29: #{tpu_custom_call.1} parent=19 // pred_check
          %p436 = pneg %p130
        $region30: #{tpu_custom_call.1} parent=19 // pred_check_branch
          %438 = sbr.rel (%p436) target = $region32
        $region31: #{tpu_custom_call.1} parent=19 // pred_region
          %p439 = scmp.lt.s32.totalorder %s28, 1
          %s440 = scalar_select %p439, %s28, 1
          %s441 = smul.addr %s440, 4
          %s442 = smul.addr %s441, 4
          %s443 = scalar_lea.vmem %s3, %s442
        $region32: #{tpu_custom_call.1} parent=19 // pred_fallthru
          _
        // Predicated region
        $region33: #{tpu_custom_call.1} parent=19 // pred_check
          %p444 = pneg %p156
        $region34: #{tpu_custom_call.1} parent=19 // pred_check_branch
          %446 = sbr.rel (%p444) target = $region36
        $region35: #{tpu_custom_call.1} parent=19 // pred_region
          %p447 = scmp.lt.s32.totalorder %s28, 1
          %s448 = scalar_select %p447, %s28, 1
          %s449 = scalar_lea.vmem %s4, %s448
        $region36: #{tpu_custom_call.1} parent=19 // pred_fallthru
          _
        // Predicated region
        $region37: #{tpu_custom_call.1} parent=19 // pred_check
          %p450 = pneg %p182
        $region38: #{tpu_custom_call.1} parent=19 // pred_check_branch
          %452 = sbr.rel (%p450) target = $region40
        $region39: #{tpu_custom_call.1} parent=19 // pred_region
          %p453 = scmp.lt.s32.totalorder %s28, 1
          %s454 = scalar_select %p453, %s28, 1
          %s455 = smul.addr %s454, 4
          %s456 = smul.addr %s455, 4
          %s457 = scalar_lea.vmem %s5, %s456
        $region40: #{tpu_custom_call.1} parent=19 // pred_fallthru
          _
        // Predicated region
        $region41: #{tpu_custom_call.1} parent=19 // pred_check
          %p458 = pneg %p208
        $region42: #{tpu_custom_call.1} parent=19 // pred_check_branch
          %460 = sbr.rel (%p458) target = $region44
        $region43: #{tpu_custom_call.1} parent=19 // pred_region
          %p461 = scmp.lt.s32.totalorder %s28, 1
          %s462 = scalar_select %p461, %s28, 1
          %s463 = scalar_lea.vmem %s6, %s462
        $region44: #{tpu_custom_call.1} parent=19 // pred_fallthru
          _
        // Predicated region
        $region45: #{tpu_custom_call.1} parent=19 // pred_check
          %p464 = pneg %p234
        $region46: #{tpu_custom_call.1} parent=19 // pred_check_branch
          %466 = sbr.rel (%p464) target = $region48
        $region47: #{tpu_custom_call.1} parent=19 // pred_region
          %p467 = scmp.lt.s32.totalorder %s28, 1
          %s468 = scalar_select %p467, %s28, 1
          %s469 = scalar_lea.vmem %s7, %s468
        $region48: #{tpu_custom_call.1} parent=19 // pred_fallthru
          _
        // Predicated region
        $region49: #{tpu_custom_call.1} parent=19 // pred_check
          %p470 = pneg %p260
        $region50: #{tpu_custom_call.1} parent=19 // pred_check_branch
          %472 = sbr.rel (%p470) target = $region52
        $region51: #{tpu_custom_call.1} parent=19 // pred_region
          %p473 = scmp.lt.s32.totalorder %s28, 1
          %s474 = scalar_select %p473, %s28, 1
          %s475 = scalar_lea.vmem %s8, %s474
        $region52: #{tpu_custom_call.1} parent=19 // pred_fallthru
          _
        // Predicated region
        $region53: #{tpu_custom_call.1} parent=19 // pred_check
          %p476 = pneg %p286
        $region54: #{tpu_custom_call.1} parent=19 // pred_check_branch
          %478 = sbr.rel (%p476) target = $region56
        $region55: #{tpu_custom_call.1} parent=19 // pred_region
          %p479 = scmp.lt.s32.totalorder %s28, 1
          %s480 = scalar_select %p479, %s28, 1
          %s481 = smul.addr %s480, 4
          %s482 = smul.addr %s481, 4
          %s483 = scalar_lea.vmem %s9, %s482
        $region56: #{tpu_custom_call.1} parent=19 // pred_fallthru
          _
        // Predicated region
        $region57: #{tpu_custom_call.1} parent=19 // pred_check
          %p484 = pneg %p312
        $region58: #{tpu_custom_call.1} parent=19 // pred_check_branch
          %486 = sbr.rel (%p484) target = $region60
        $region59: #{tpu_custom_call.1} parent=19 // pred_region
          %p487 = scmp.lt.s32.totalorder %s28, 1
          %s488 = scalar_select %p487, %s28, 1
          %s489 = scalar_lea.vmem %s10, %s488
        $region60: #{tpu_custom_call.1} parent=19 // pred_fallthru
          _
        // Predicated region
        $region61: #{tpu_custom_call.1} parent=19 // pred_check
          %p490 = pneg %p338
        $region62: #{tpu_custom_call.1} parent=19 // pred_check_branch
          %492 = sbr.rel (%p490) target = $region64
        $region63: #{tpu_custom_call.1} parent=19 // pred_region
          %p493 = scmp.lt.s32.totalorder %s28, 1
          %s494 = scalar_select %p493, %s28, 1
          %s495 = smul.addr %s494, 16
          %s496 = smul.addr %s495, 4
          %s497 = scalar_lea.vmem %s11, %s496
        $region64: #{tpu_custom_call.1} parent=19 // pred_fallthru
          _
        // Predicated region
        $region65: #{tpu_custom_call.1} parent=19 // pred_check
          %p498 = pneg %p364
        $region66: #{tpu_custom_call.1} parent=19 // pred_check_branch
          %500 = sbr.rel (%p498) target = $region68
        $region67: #{tpu_custom_call.1} parent=19 // pred_region
          %p501 = scmp.lt.s32.totalorder %s28, 1
          %s502 = scalar_select %p501, %s28, 1
          %s503 = scalar_lea.vmem %s12, %s502
        $region68: #{tpu_custom_call.1} parent=19 // pred_fallthru
          _
      $region20: #{tpu_custom_call.1} parent=5 // pred_fallthru
        _
      %p504 = scmp.le.s32.totalorder 1, %s20
      %p505 = scmp.lt.s32.totalorder %s20, 3
      %p506 = pnand %p504, %p505
      %p507 = pneg %p506
      // Predicated region
      $region69: #{tpu_custom_call.1} parent=5 // pred_check
        _
      $region70: #{tpu_custom_call.1} parent=5 // pred_check_branch
        %509 = sbr.rel (%p506) target = $region72
      $region71: #{tpu_custom_call.1} parent=5 // pred_region
        %s510 = ssub.s32 %s20, 1
        %s511 = smul.u32 2, %s29
        %p512 = scmp.lt.s32.totalorder %s511, 1
        %s513 = scalar_select %p512, %s511, 1
        %s514 = smul.addr %s513, 8
        %s515 = scalar_lea.vmem %s0, %s514
        %p516 = pneg %p58
        %p517 = pneg %p55
        %p518 = scmp.lt.s32.totalorder %s30, 1
        %s519 = scalar_select %p518, %s30, 1
        %s520 = scalar_lea.vmem %s1, %s519
        %p521 = pneg %p84
        %p522 = pneg %p81
        %p523 = scmp.lt.s32.totalorder %s30, 1
        %s524 = scalar_select %p523, %s30, 1
        %s525 = scalar_lea.vmem %s2, %s524
        %p526 = pneg %p110
        %p527 = pneg %p107
        %p528 = scmp.lt.s32.totalorder %s30, 1
        %s529 = scalar_select %p528, %s30, 1
        %s530 = smul.addr %s529, 4
        %s531 = smul.addr %s530, 4
        %s532 = scalar_lea.vmem %s3, %s531
        %p533 = pneg %p136
        %p534 = pneg %p133
        %p535 = scmp.lt.s32.totalorder %s30, 1
        %s536 = scalar_select %p535, %s30, 1
        %s537 = scalar_lea.vmem %s4, %s536
        %p538 = pneg %p162
        %p539 = pneg %p159
        %p540 = scmp.lt.s32.totalorder %s30, 1
        %s541 = scalar_select %p540, %s30, 1
        %s542 = smul.addr %s541, 4
        %s543 = smul.addr %s542, 4
        %s544 = scalar_lea.vmem %s5, %s543
        %p545 = pneg %p188
        %p546 = pneg %p185
        %p547 = scmp.lt.s32.totalorder %s30, 1
        %s548 = scalar_select %p547, %s30, 1
        %s549 = scalar_lea.vmem %s6, %s548
        %p550 = pneg %p214
        %p551 = pneg %p211
        %p552 = scmp.lt.s32.totalorder %s30, 1
        %s553 = scalar_select %p552, %s30, 1
        %s554 = scalar_lea.vmem %s7, %s553
        %p555 = pneg %p240
        %p556 = pneg %p237
        %p557 = scmp.lt.s32.totalorder %s30, 1
        %s558 = scalar_select %p557, %s30, 1
        %s559 = scalar_lea.vmem %s8, %s558
        %p560 = pneg %p266
        %p561 = pneg %p263
        %p562 = scmp.lt.s32.totalorder %s30, 1
        %s563 = scalar_select %p562, %s30, 1
        %s564 = smul.addr %s563, 4
        %s565 = smul.addr %s564, 4
        %s566 = scalar_lea.vmem %s9, %s565
        %p567 = pneg %p292
        %p568 = pneg %p289
        %p569 = scmp.lt.s32.totalorder %s30, 1
        %s570 = scalar_select %p569, %s30, 1
        %s571 = scalar_lea.vmem %s10, %s570
        %p572 = pneg %p318
        %p573 = pneg %p315
        %p574 = scmp.lt.s32.totalorder %s30, 1
        %s575 = scalar_select %p574, %s30, 1
        %s576 = smul.addr %s575, 16
        %s577 = smul.addr %s576, 4
        %s578 = scalar_lea.vmem %s11, %s577
        %p579 = pneg %p344
        %p580 = pneg %p341
        %p581 = scmp.lt.s32.totalorder %s30, 1
        %s582 = scalar_select %p581, %s30, 1
        %s583 = scalar_lea.vmem %s12, %s582
        %p584 = pneg %p370
        %p585 = pneg %p367
        %p586 = pneg %p396
        %p587 = pneg %p393
        %s588 = smul.u32 2, %s29
        %p589 = scmp.lt.s32.totalorder %s588, 1
        %s590 = scalar_select %p589, %s588, 1
        %s591 = smul.addr %s590, 8
        %s592 = scalar_lea.vmem %s0, %s591
        %s593 = smul.u32 2, %s29
        %p594 = scmp.lt.s32.totalorder %s30, 1
        %s595 = scalar_select %p594, %s30, 1
        %s596 = scalar_lea.vmem %s1, %s595
        %p597 = scmp.lt.s32.totalorder %s30, 1
        %s598 = scalar_select %p597, %s30, 1
        %s599 = scalar_lea.vmem %s2, %s598
        %p600 = scmp.lt.s32.totalorder %s30, 1
        %s601 = scalar_select %p600, %s30, 1
        %s602 = smul.addr %s601, 4
        %s603 = smul.addr %s602, 4
        %s604 = scalar_lea.vmem %s3, %s603
        %p605 = scmp.lt.s32.totalorder %s30, 1
        %s606 = scalar_select %p605, %s30, 1
        %s607 = scalar_lea.vmem %s4, %s606
        %p608 = scmp.lt.s32.totalorder %s30, 1
        %s609 = scalar_select %p608, %s30, 1
        %s610 = smul.addr %s609, 4
        %s611 = smul.addr %s610, 4
        %s612 = scalar_lea.vmem %s5, %s611
        %p613 = scmp.lt.s32.totalorder %s30, 1
        %s614 = scalar_select %p613, %s30, 1
        %s615 = scalar_lea.vmem %s6, %s614
        %p616 = scmp.lt.s32.totalorder %s30, 1
        %s617 = scalar_select %p616, %s30, 1
        %s618 = scalar_lea.vmem %s7, %s617
        %p619 = scmp.lt.s32.totalorder %s30, 1
        %s620 = scalar_select %p619, %s30, 1
        %s621 = scalar_lea.vmem %s8, %s620
        %p622 = scmp.lt.s32.totalorder %s30, 1
        %s623 = scalar_select %p622, %s30, 1
        %s624 = smul.addr %s623, 4
        %s625 = smul.addr %s624, 4
        %s626 = scalar_lea.vmem %s9, %s625
        %p627 = scmp.lt.s32.totalorder %s30, 1
        %s628 = scalar_select %p627, %s30, 1
        %s629 = scalar_lea.vmem %s10, %s628
        %p630 = scmp.lt.s32.totalorder %s30, 1
        %s631 = scalar_select %p630, %s30, 1
        %s632 = smul.addr %s631, 16
        %s633 = smul.addr %s632, 4
        %s634 = scalar_lea.vmem %s11, %s633
        %p635 = scmp.lt.s32.totalorder %s30, 1
        %s636 = scalar_select %p635, %s30, 1
        %s637 = scalar_lea.vmem %s12, %s636
        %s638 = smul.u32 2, %s29
        %p640 = scmp.eq.s32.totalorder %s30, 0
        // Predicated region
        $region73: #{tpu_custom_call.1} parent=71 // pred_check
          %p641 = pneg %p640
        $region74: #{tpu_custom_call.1} parent=71 // pred_check_branch
          %643 = sbr.rel (%p641) target = $region76
        $region75: #{tpu_custom_call.1} parent=71 // pred_region
          %v644 = vld [vmem:[%s592] sm:$0xff]
          %v645 = vld [vmem:[%s592 + $0x8] sm:$0xff]
          %vm646 = vcmask 261120
          %647 = vst.msk [vmem:[#allocation2] sm:$0xff] %vm646, %v644
          %648 = vst.msk [vmem:[#allocation2 + $0x8] sm:$0xff] %vm646, %v645
        $region76: #{tpu_custom_call.1} parent=71 // pred_fallthru
          _
        %v649 = vld [vmem:[#allocation2] sm:$0xff]
        %v650 = vld [vmem:[#allocation2 + $0x8] sm:$0xff]
        %vm651 = vcmask 261120
        %v652 = vsel %vm651, %v649, 0.0
        %653 = vadd.xlane.f32.xlu0 %v652
        %v654 = vpop.xlane.xlu0 %653
        %v655 = vsel %vm651, %v650, 0.0
        %656 = vadd.xlane.f32.xlu0 %v655
        %v657 = vpop.xlane.xlu0 %656
        %v658 = vrcp.pop 32.0
        %v659 = vmul.f32 32.0, %v658
        %v660 = vsub.f32 1.0, %v659
        %v661 = vmul.f32 %v658, %v660
        %v662 = vadd.f32 %v658, %v661
        %vm663 = vweird.f32 %v658
        %v664 = vsel %vm663, %v658, %v662
        %v665 = vmul.f32 %v654, %v664
        %v666 = vmul.f32 %v657, %v664
        %v667 = vsub.f32 %v649, %v665
        %v668 = vsub.f32 %v650, %v666
        %v669 = vmul.f32 %v667, %v667
        %v670 = vmul.f32 %v668, %v668
        %v671 = vsel %vm651, %v669, 0.0
        %672 = vadd.xlane.f32.xlu0 %v671
        %v673 = vpop.xlane.xlu0 %672
        %v674 = vsel %vm651, %v670, 0.0
        %675 = vadd.xlane.f32.xlu0 %v674
        %v676 = vpop.xlane.xlu0 %675
        %v677 = vmul.f32 %v673, %v664
        %v678 = vmul.f32 %v676, %v664
        %v679 = vadd.f32 %v677, 1e-05
        %v680 = vadd.f32 %v678, 1e-05
        %v681 = vrsqrt.pop %v679
        %v682 = vmul.f32 %v681, %v679
        %v683 = vmul.f32 %v682, %v681
        %v684 = vmul.f32 0.5, %v683
        %v685 = vsub.f32 1.5, %v684
        %v686 = vmul.f32 %v681, %v685
        %vm687 = vweird.f32 %v679
        %vm688 = vweird.f32 %v681
        %vm689 = vmor %vm687, %vm688
        %v690 = vsel %vm689, %v681, %v686
        %v691 = vrsqrt.pop %v680
        %v692 = vmul.f32 %v691, %v680
        %v693 = vmul.f32 %v692, %v691
        %v694 = vmul.f32 0.5, %v693
        %v695 = vsub.f32 1.5, %v694
        %v696 = vmul.f32 %v691, %v695
        %vm697 = vweird.f32 %v680
        %vm698 = vweird.f32 %v691
        %vm699 = vmor %vm697, %vm698
        %v700 = vsel %vm699, %v691, %v696
        %v701 = vmul.f32 %v667, %v690
        %v702 = vmul.f32 %v668, %v700
        %v703 = vld [vmem:[%s596] sm:$0x1]
        %v705 = vperm.slane %v703, 0
        %v707 = vmul.f32 %v701, %v705
        %v708 = vmul.f32 %v702, %v705
        %v709 = vld [vmem:[%s599] sm:$0x1]
        %v711 = vperm.slane %v709, 0
        %v713 = vadd.f32 %v707, %v711
        %v714 = vadd.f32 %v708, %v711
        %v715 = vpack.c.bf16 %v714, %v713
        %v716 = vld [vmem:[%s604] sm:$0xf]
        %v717 = vld [vmem:[%s604 + $0x4] sm:$0xf]
        %v718 = vld [vmem:[%s604 + $0x8] sm:$0xf]
        %v719 = vld [vmem:[%s604 + $0xc] sm:$0xf]
        %v720 = vld [vmem:[%s607] sm:$0x1]
        %v722 = vperm.slane %v720, 0
        %v728 = vunpack.c.l.b16 %v716
        %v729 = vunpack.c.l.b16 %v717
        %v730 = vunpack.c.l.b16 %v718
        %v731 = vunpack.c.l.b16 %v719
        %v732 = vpack.c.b16 %v729, %v728
        %v733 = vpack.c.b16 %v731, %v730
        %v737 = vsel %vm651, %v715, 0
        %739 = vmatpush.bf16.msra.mxu0 0
        %740 = vmatpush.bf16.msra.mxu0 0
        %741 = vmatpush.bf16.msra.mxu0 0
        %742 = vmatpush.bf16.msra.mxu0 0
        %743 = vmatpush.bf16.msra.mxu0 0
        %744 = vmatpush.bf16.msra.mxu0 0
        %745 = vmatpush.bf16.msra.mxu0 %v733
        %746 = vmatpush.bf16.msra.mxu0 %v732
        %747 = vmatmul.bf16.gmra.mxu0 %v737
        %v748 = vpop.f32.mrf.mxu0
        %v749 = vadd.f32 %v722, %v748
        %v750 = vpop.f32.mrf.mxu0
        %v751 = vadd.f32 %v722, %v750
        %752 = vdwg.mxu0
        %755 = vrot.lane.b32.xlu0 %v749, 120
        %v756 = vpop.permute.xlu0 %755
        %757 = vrot.lane.b32.xlu0 %v751, 120
        %v758 = vpop.permute.xlu0 %757
        %761 = vrot.lane.b32.xlu0 %v749, 112
        %v762 = vpop.permute.xlu0 %761
        %763 = vrot.lane.b32.xlu0 %v751, 112
        %v764 = vpop.permute.xlu0 %763
        %767 = vrot.lane.b32.xlu0 %v749, 104
        %v768 = vpop.permute.xlu0 %767
        %769 = vrot.lane.b32.xlu0 %v751, 104
        %v770 = vpop.permute.xlu0 %769
        %v773 = vpack.c.bf16 %v749, %v749
        %v774 = vpack.c.bf16 %v751, %v751
        %v775 = vpack.c.bf16 %v756, %v756
        %v776 = vpack.c.bf16 %v758, %v758
        %v777 = vpack.c.bf16 %v762, %v762
        %v778 = vpack.c.bf16 %v764, %v764
        %v779 = vpack.c.bf16 %v768, %v768
        %v780 = vpack.c.bf16 %v770, %v770
        %v782 = vunpack.c.l.b16 %v773
        %v783 = vpack.c.b16 %v782, %v782
        %784 = vrot.lane.b32.xlu0 %v783, 96
        %v785 = vpop.permute.xlu0 %784
        %vm786 = vcmask 64512
        %v788 = vsel %vm786, %v773, 0
        %v791 = vsel %vm786, %v785, 0
        %793 = vmatpush.bf16.xpose.msra.mxu0 0
        %794 = vmatpush.bf16.xpose.msra.mxu0 0
        %795 = vmatpush.bf16.xpose.msra.mxu0 0
        %796 = vmatpush.bf16.xpose.msra.mxu0 0
        %797 = vmatpush.bf16.xpose.msra.mxu0 0
        %798 = vmatpush.bf16.xpose.msra.mxu0 0
        %799 = vmatpush.bf16.xpose.msra.mxu0 0
        %800 = vmatpush.bf16.xpose.msra.mxu0 %v791
        %801 = vmatmul.bf16.gmra.mxu0 %v788
        %v802 = vpop.f32.mrf.mxu0
        %v803 = vadd.f32 0.0, %v802
        %v804 = vpop.f32.mrf.mxu0
        %805 = vdwg.mxu0
        %v807 = vunpack.c.l.b16 %v774
        %v808 = vpack.c.b16 %v807, %v807
        %809 = vrot.lane.b32.xlu0 %v808, 96
        %v810 = vpop.permute.xlu0 %809
        %v812 = vsel %vm786, %v774, 0
        %v815 = vsel %vm786, %v810, 0
        %817 = vmatpush.bf16.xpose.msra.mxu0 0
        %818 = vmatpush.bf16.xpose.msra.mxu0 0
        %819 = vmatpush.bf16.xpose.msra.mxu0 0
        %820 = vmatpush.bf16.xpose.msra.mxu0 0
        %821 = vmatpush.bf16.xpose.msra.mxu0 0
        %822 = vmatpush.bf16.xpose.msra.mxu0 0
        %823 = vmatpush.bf16.xpose.msra.mxu0 0
        %824 = vmatpush.bf16.xpose.msra.mxu0 %v815
        %825 = vmatmul.bf16.gmra.mxu0 %v812
        %v826 = vpop.f32.mrf.mxu0
        %v827 = vadd.f32 0.0, %v826
        %v828 = vpop.f32.mrf.mxu0
        %829 = vdwg.mxu0
        %v831 = vunpack.c.l.b16 %v775
        %v832 = vpack.c.b16 %v831, %v831
        %833 = vrot.lane.b32.xlu0 %v832, 96
        %v834 = vpop.permute.xlu0 %833
        %v836 = vsel %vm786, %v775, 0
        %v839 = vsel %vm786, %v834, 0
        %841 = vmatpush.bf16.xpose.msra.mxu0 0
        %842 = vmatpush.bf16.xpose.msra.mxu0 0
        %843 = vmatpush.bf16.xpose.msra.mxu0 0
        %844 = vmatpush.bf16.xpose.msra.mxu0 0
        %845 = vmatpush.bf16.xpose.msra.mxu0 0
        %846 = vmatpush.bf16.xpose.msra.mxu0 0
        %847 = vmatpush.bf16.xpose.msra.mxu0 0
        %848 = vmatpush.bf16.xpose.msra.mxu0 %v839
        %849 = vmatmul.bf16.gmra.mxu0 %v836
        %v850 = vpop.f32.mrf.mxu0
        %v851 = vadd.f32 0.0, %v850
        %v852 = vpop.f32.mrf.mxu0
        %853 = vdwg.mxu0
        %v855 = vunpack.c.l.b16 %v776
        %v856 = vpack.c.b16 %v855, %v855
        %857 = vrot.lane.b32.xlu0 %v856, 96
        %v858 = vpop.permute.xlu0 %857
        %v860 = vsel %vm786, %v776, 0
        %v863 = vsel %vm786, %v858, 0
        %865 = vmatpush.bf16.xpose.msra.mxu0 0
        %866 = vmatpush.bf16.xpose.msra.mxu0 0
        %867 = vmatpush.bf16.xpose.msra.mxu0 0
        %868 = vmatpush.bf16.xpose.msra.mxu0 0
        %869 = vmatpush.bf16.xpose.msra.mxu0 0
        %870 = vmatpush.bf16.xpose.msra.mxu0 0
        %871 = vmatpush.bf16.xpose.msra.mxu0 0
        %872 = vmatpush.bf16.xpose.msra.mxu0 %v863
        %873 = vmatmul.bf16.gmra.mxu0 %v860
        %v874 = vpop.f32.mrf.mxu0
        %v875 = vadd.f32 0.0, %v874
        %v876 = vpop.f32.mrf.mxu0
        %877 = vdwg.mxu0
        %v879 = vunpack.c.l.b16 %v777
        %v880 = vpack.c.b16 %v879, %v879
        %881 = vrot.lane.b32.xlu0 %v880, 96
        %v882 = vpop.permute.xlu0 %881
        %v884 = vsel %vm786, %v777, 0
        %v887 = vsel %vm786, %v882, 0
        %889 = vmatpush.bf16.xpose.msra.mxu0 0
        %890 = vmatpush.bf16.xpose.msra.mxu0 0
        %891 = vmatpush.bf16.xpose.msra.mxu0 0
        %892 = vmatpush.bf16.xpose.msra.mxu0 0
        %893 = vmatpush.bf16.xpose.msra.mxu0 0
        %894 = vmatpush.bf16.xpose.msra.mxu0 0
        %895 = vmatpush.bf16.xpose.msra.mxu0 0
        %896 = vmatpush.bf16.xpose.msra.mxu0 %v887
        %897 = vmatmul.bf16.gmra.mxu0 %v884
        %v898 = vpop.f32.mrf.mxu0
        %v899 = vadd.f32 0.0, %v898
        %v900 = vpop.f32.mrf.mxu0
        %901 = vdwg.mxu0
        %v903 = vunpack.c.l.b16 %v778
        %v904 = vpack.c.b16 %v903, %v903
        %905 = vrot.lane.b32.xlu0 %v904, 96
        %v906 = vpop.permute.xlu0 %905
        %v908 = vsel %vm786, %v778, 0
        %v911 = vsel %vm786, %v906, 0
        %913 = vmatpush.bf16.xpose.msra.mxu0 0
        %914 = vmatpush.bf16.xpose.msra.mxu0 0
        %915 = vmatpush.bf16.xpose.msra.mxu0 0
        %916 = vmatpush.bf16.xpose.msra.mxu0 0
        %917 = vmatpush.bf16.xpose.msra.mxu0 0
        %918 = vmatpush.bf16.xpose.msra.mxu0 0
        %919 = vmatpush.bf16.xpose.msra.mxu0 0
        %920 = vmatpush.bf16.xpose.msra.mxu0 %v911
        %921 = vmatmul.bf16.gmra.mxu0 %v908
        %v922 = vpop.f32.mrf.mxu0
        %v923 = vadd.f32 0.0, %v922
        %v924 = vpop.f32.mrf.mxu0
        %925 = vdwg.mxu0
        %v927 = vunpack.c.l.b16 %v779
        %v928 = vpack.c.b16 %v927, %v927
        %929 = vrot.lane.b32.xlu0 %v928, 96
        %v930 = vpop.permute.xlu0 %929
        %v932 = vsel %vm786, %v779, 0
        %v935 = vsel %vm786, %v930, 0
        %937 = vmatpush.bf16.xpose.msra.mxu0 0
        %938 = vmatpush.bf16.xpose.msra.mxu0 0
        %939 = vmatpush.bf16.xpose.msra.mxu0 0
        %940 = vmatpush.bf16.xpose.msra.mxu0 0
        %941 = vmatpush.bf16.xpose.msra.mxu0 0
        %942 = vmatpush.bf16.xpose.msra.mxu0 0
        %943 = vmatpush.bf16.xpose.msra.mxu0 0
        %944 = vmatpush.bf16.xpose.msra.mxu0 %v935
        %945 = vmatmul.bf16.gmra.mxu0 %v932
        %v946 = vpop.f32.mrf.mxu0
        %v947 = vadd.f32 0.0, %v946
        %v948 = vpop.f32.mrf.mxu0
        %949 = vdwg.mxu0
        %v951 = vunpack.c.l.b16 %v780
        %v952 = vpack.c.b16 %v951, %v951
        %953 = vrot.lane.b32.xlu0 %v952, 96
        %v954 = vpop.permute.xlu0 %953
        %v956 = vsel %vm786, %v780, 0
        %v959 = vsel %vm786, %v954, 0
        %961 = vmatpush.bf16.xpose.msra.mxu0 0
        %962 = vmatpush.bf16.xpose.msra.mxu0 0
        %963 = vmatpush.bf16.xpose.msra.mxu0 0
        %964 = vmatpush.bf16.xpose.msra.mxu0 0
        %965 = vmatpush.bf16.xpose.msra.mxu0 0
        %966 = vmatpush.bf16.xpose.msra.mxu0 0
        %967 = vmatpush.bf16.xpose.msra.mxu0 0
        %968 = vmatpush.bf16.xpose.msra.mxu0 %v959
        %969 = vmatmul.bf16.gmra.mxu0 %v956
        %v970 = vpop.f32.mrf.mxu0
        %v971 = vadd.f32 0.0, %v970
        %v972 = vpop.f32.mrf.mxu0
        %973 = vdwg.mxu0
        %v974 = vmul.f32 %v803, 0.35355338
        %v975 = vmul.f32 %v827, 0.35355338
        %v976 = vmul.f32 %v851, 0.35355338
        %v977 = vmul.f32 %v875, 0.35355338
        %v978 = vmul.f32 %v899, 0.35355338
        %v979 = vmul.f32 %v923, 0.35355338
        %v980 = vmul.f32 %v947, 0.35355338
        %v981 = vmul.f32 %v971, 0.35355338
        %v982 = vlaneseq
        %v983 = vshrl.u32 %v982, 7
        %v984 = vlaneseq
        %v985 = vand.u32 %v984, 127
        %vm986 = vcmp.le.s32.totalorder %v985, %v983
        %v987 = vsel %vm986, 1, 0
        %vm988 = vcmp.eq.s32.totalorder %v987, 1
        %v989 = vsel %vm988, %v974, -1e+30
        %v990 = vsel %vm988, %v975, -1e+30
        %v991 = vsel %vm988, %v976, -1e+30
        %v992 = vsel %vm988, %v977, -1e+30
        %v993 = vsel %vm988, %v978, -1e+30
        %v994 = vsel %vm988, %v979, -1e+30
        %v995 = vsel %vm988, %v980, -1e+30
        %v996 = vsel %vm988, %v981, -1e+30
        %v997 = vsel %vm786, %v989, -inf
        %998 = vmax.xlane.f32.xlu0 %v997
        %v999 = vpop.xlane.xlu0 %998
        %v1000 = vsel %vm786, %v990, -inf
        %1001 = vmax.xlane.f32.xlu0 %v1000
        %v1002 = vpop.xlane.xlu0 %1001
        %v1003 = vsel %vm786, %v991, -inf
        %1004 = vmax.xlane.f32.xlu0 %v1003
        %v1005 = vpop.xlane.xlu0 %1004
        %v1006 = vsel %vm786, %v992, -inf
        %1007 = vmax.xlane.f32.xlu0 %v1006
        %v1008 = vpop.xlane.xlu0 %1007
        %v1009 = vsel %vm786, %v993, -inf
        %1010 = vmax.xlane.f32.xlu0 %v1009
        %v1011 = vpop.xlane.xlu0 %1010
        %v1012 = vsel %vm786, %v994, -inf
        %1013 = vmax.xlane.f32.xlu0 %v1012
        %v1014 = vpop.xlane.xlu0 %1013
        %v1015 = vsel %vm786, %v995, -inf
        %1016 = vmax.xlane.f32.xlu0 %v1015
        %v1017 = vpop.xlane.xlu0 %1016
        %v1018 = vsel %vm786, %v996, -inf
        %1019 = vmax.xlane.f32.xlu0 %v1018
        %v1020 = vpop.xlane.xlu0 %1019
        %v1021 = vsub.f32 %v989, %v999
        %v1022 = vsub.f32 %v990, %v1002
        %v1023 = vsub.f32 %v991, %v1005
        %v1024 = vsub.f32 %v992, %v1008
        %v1025 = vsub.f32 %v993, %v1011
        %v1026 = vsub.f32 %v994, %v1014
        %v1027 = vsub.f32 %v995, %v1017
        %v1028 = vsub.f32 %v996, %v1020
        %v1029 = vmul.f32 %v1021, 1.442695
        %v1030 = vpow.pop %v1029
        %v1031 = vmul.f32 %v1022, 1.442695
        %v1032 = vpow.pop %v1031
        %v1033 = vmul.f32 %v1023, 1.442695
        %v1034 = vpow.pop %v1033
        %v1035 = vmul.f32 %v1024, 1.442695
        %v1036 = vpow.pop %v1035
        %v1037 = vmul.f32 %v1025, 1.442695
        %v1038 = vpow.pop %v1037
        %v1039 = vmul.f32 %v1026, 1.442695
        %v1040 = vpow.pop %v1039
        %v1041 = vmul.f32 %v1027, 1.442695
        %v1042 = vpow.pop %v1041
        %v1043 = vmul.f32 %v1028, 1.442695
        %v1044 = vpow.pop %v1043
        %v1045 = vsel %vm786, %v1030, 0.0
        %1046 = vadd.xlane.f32.xlu0 %v1045
        %v1047 = vpop.xlane.xlu0 %1046
        %v1048 = vsel %vm786, %v1032, 0.0
        %1049 = vadd.xlane.f32.xlu0 %v1048
        %v1050 = vpop.xlane.xlu0 %1049
        %v1051 = vsel %vm786, %v1034, 0.0
        %1052 = vadd.xlane.f32.xlu0 %v1051
        %v1053 = vpop.xlane.xlu0 %1052
        %v1054 = vsel %vm786, %v1036, 0.0
        %1055 = vadd.xlane.f32.xlu0 %v1054
        %v1056 = vpop.xlane.xlu0 %1055
        %v1057 = vsel %vm786, %v1038, 0.0
        %1058 = vadd.xlane.f32.xlu0 %v1057
        %v1059 = vpop.xlane.xlu0 %1058
        %v1060 = vsel %vm786, %v1040, 0.0
        %1061 = vadd.xlane.f32.xlu0 %v1060
        %v1062 = vpop.xlane.xlu0 %1061
        %v1063 = vsel %vm786, %v1042, 0.0
        %1064 = vadd.xlane.f32.xlu0 %v1063
        %v1065 = vpop.xlane.xlu0 %1064
        %v1066 = vsel %vm786, %v1044, 0.0
        %1067 = vadd.xlane.f32.xlu0 %v1066
        %v1068 = vpop.xlane.xlu0 %1067
        %v1069 = vrcp.pop %v1047
        %v1070 = vrcp.pop %v1050
        %v1071 = vrcp.pop %v1053
        %v1072 = vrcp.pop %v1056
        %v1073 = vrcp.pop %v1059
        %v1074 = vrcp.pop %v1062
        %v1075 = vrcp.pop %v1065
        %v1076 = vrcp.pop %v1068
        %v1077 = vpack.c.bf16 %v1030, %v1030
        %v1078 = vpack.c.bf16 %v1032, %v1032
        %v1079 = vpack.c.bf16 %v1034, %v1034
        %v1080 = vpack.c.bf16 %v1036, %v1036
        %v1081 = vpack.c.bf16 %v1038, %v1038
        %v1082 = vpack.c.bf16 %v1040, %v1040
        %v1083 = vpack.c.bf16 %v1042, %v1042
        %v1084 = vpack.c.bf16 %v1044, %v1044
        %1085 = vrot.lane.b32.xlu0 %v783, 64
        %v1086 = vpop.permute.xlu0 %1085
        %v1088 = vsel %vm786, %v1077, 0
        %vm1090 = vcmask 1043456
        %v1092 = vsel %vm1090, %v1086, 0
        %1094 = vmatpush.bf16.msra.mxu0 0
        %1095 = vmatpush.bf16.msra.mxu0 0
        %1096 = vmatpush.bf16.msra.mxu0 0
        %1097 = vmatpush.bf16.msra.mxu0 0
        %1098 = vmatpush.bf16.msra.mxu0 0
        %1099 = vmatpush.bf16.msra.mxu0 0
        %1100 = vmatpush.bf16.msra.mxu0 0
        %1101 = vmatpush.bf16.msra.mxu0 %v1092
        %1102 = vmatmul.bf16.gmra.mxu0 %v1088
        %v1103 = vpop.f32.mrf.mxu0
        %v1104 = vadd.f32 0.0, %v1103
        %v1105 = vpop.f32.mrf.mxu0
        %1106 = vdwg.mxu0
        %1107 = vrot.lane.b32.xlu0 %v808, 64
        %v1108 = vpop.permute.xlu0 %1107
        %v1110 = vsel %vm786, %v1078, 0
        %v1113 = vsel %vm1090, %v1108, 0
        %1115 = vmatpush.bf16.msra.mxu0 0
        %1116 = vmatpush.bf16.msra.mxu0 0
        %1117 = vmatpush.bf16.msra.mxu0 0
        %1118 = vmatpush.bf16.msra.mxu0 0
        %1119 = vmatpush.bf16.msra.mxu0 0
        %1120 = vmatpush.bf16.msra.mxu0 0
        %1121 = vmatpush.bf16.msra.mxu0 0
        %1122 = vmatpush.bf16.msra.mxu0 %v1113
        %1123 = vmatmul.bf16.gmra.mxu0 %v1110
        %v1124 = vpop.f32.mrf.mxu0
        %v1125 = vadd.f32 0.0, %v1124
        %v1126 = vpop.f32.mrf.mxu0
        %1127 = vdwg.mxu0
        %1128 = vrot.lane.b32.xlu0 %v832, 64
        %v1129 = vpop.permute.xlu0 %1128
        %v1131 = vsel %vm786, %v1079, 0
        %v1134 = vsel %vm1090, %v1129, 0
        %1136 = vmatpush.bf16.msra.mxu0 0
        %1137 = vmatpush.bf16.msra.mxu0 0
        %1138 = vmatpush.bf16.msra.mxu0 0
        %1139 = vmatpush.bf16.msra.mxu0 0
        %1140 = vmatpush.bf16.msra.mxu0 0
        %1141 = vmatpush.bf16.msra.mxu0 0
        %1142 = vmatpush.bf16.msra.mxu0 0
        %1143 = vmatpush.bf16.msra.mxu0 %v1134
        %1144 = vmatmul.bf16.gmra.mxu0 %v1131
        %v1145 = vpop.f32.mrf.mxu0
        %v1146 = vadd.f32 0.0, %v1145
        %v1147 = vpop.f32.mrf.mxu0
        %1148 = vdwg.mxu0
        %1149 = vrot.lane.b32.xlu0 %v856, 64
        %v1150 = vpop.permute.xlu0 %1149
        %v1152 = vsel %vm786, %v1080, 0
        %v1155 = vsel %vm1090, %v1150, 0
        %1157 = vmatpush.bf16.msra.mxu0 0
        %1158 = vmatpush.bf16.msra.mxu0 0
        %1159 = vmatpush.bf16.msra.mxu0 0
        %1160 = vmatpush.bf16.msra.mxu0 0
        %1161 = vmatpush.bf16.msra.mxu0 0
        %1162 = vmatpush.bf16.msra.mxu0 0
        %1163 = vmatpush.bf16.msra.mxu0 0
        %1164 = vmatpush.bf16.msra.mxu0 %v1155
        %1165 = vmatmul.bf16.gmra.mxu0 %v1152
        %v1166 = vpop.f32.mrf.mxu0
        %v1167 = vadd.f32 0.0, %v1166
        %v1168 = vpop.f32.mrf.mxu0
        %1169 = vdwg.mxu0
        %1170 = vrot.lane.b32.xlu0 %v880, 64
        %v1171 = vpop.permute.xlu0 %1170
        %v1173 = vsel %vm786, %v1081, 0
        %v1176 = vsel %vm1090, %v1171, 0
        %1178 = vmatpush.bf16.msra.mxu0 0
        %1179 = vmatpush.bf16.msra.mxu0 0
        %1180 = vmatpush.bf16.msra.mxu0 0
        %1181 = vmatpush.bf16.msra.mxu0 0
        %1182 = vmatpush.bf16.msra.mxu0 0
        %1183 = vmatpush.bf16.msra.mxu0 0
        %1184 = vmatpush.bf16.msra.mxu0 0
        %1185 = vmatpush.bf16.msra.mxu0 %v1176
        %1186 = vmatmul.bf16.gmra.mxu0 %v1173
        %v1187 = vpop.f32.mrf.mxu0
        %v1188 = vadd.f32 0.0, %v1187
        %v1189 = vpop.f32.mrf.mxu0
        %1190 = vdwg.mxu0
        %1191 = vrot.lane.b32.xlu0 %v904, 64
        %v1192 = vpop.permute.xlu0 %1191
        %v1194 = vsel %vm786, %v1082, 0
        %v1197 = vsel %vm1090, %v1192, 0
        %1199 = vmatpush.bf16.msra.mxu0 0
        %1200 = vmatpush.bf16.msra.mxu0 0
        %1201 = vmatpush.bf16.msra.mxu0 0
        %1202 = vmatpush.bf16.msra.mxu0 0
        %1203 = vmatpush.bf16.msra.mxu0 0
        %1204 = vmatpush.bf16.msra.mxu0 0
        %1205 = vmatpush.bf16.msra.mxu0 0
        %1206 = vmatpush.bf16.msra.mxu0 %v1197
        %1207 = vmatmul.bf16.gmra.mxu0 %v1194
        %v1208 = vpop.f32.mrf.mxu0
        %v1209 = vadd.f32 0.0, %v1208
        %v1210 = vpop.f32.mrf.mxu0
        %1211 = vdwg.mxu0
        %1212 = vrot.lane.b32.xlu0 %v928, 64
        %v1213 = vpop.permute.xlu0 %1212
        %v1215 = vsel %vm786, %v1083, 0
        %v1218 = vsel %vm1090, %v1213, 0
        %1220 = vmatpush.bf16.msra.mxu0 0
        %1221 = vmatpush.bf16.msra.mxu0 0
        %1222 = vmatpush.bf16.msra.mxu0 0
        %1223 = vmatpush.bf16.msra.mxu0 0
        %1224 = vmatpush.bf16.msra.mxu0 0
        %1225 = vmatpush.bf16.msra.mxu0 0
        %1226 = vmatpush.bf16.msra.mxu0 0
        %1227 = vmatpush.bf16.msra.mxu0 %v1218
        %1228 = vmatmul.bf16.gmra.mxu0 %v1215
        %v1229 = vpop.f32.mrf.mxu0
        %v1230 = vadd.f32 0.0, %v1229
        %v1231 = vpop.f32.mrf.mxu0
        %1232 = vdwg.mxu0
        %1233 = vrot.lane.b32.xlu0 %v952, 64
        %v1234 = vpop.permute.xlu0 %1233
        %v1236 = vsel %vm786, %v1084, 0
        %v1239 = vsel %vm1090, %v1234, 0
        %1241 = vmatpush.bf16.msra.mxu0 0
        %1242 = vmatpush.bf16.msra.mxu0 0
        %1243 = vmatpush.bf16.msra.mxu0 0
        %1244 = vmatpush.bf16.msra.mxu0 0
        %1245 = vmatpush.bf16.msra.mxu0 0
        %1246 = vmatpush.bf16.msra.mxu0 0
        %1247 = vmatpush.bf16.msra.mxu0 0
        %1248 = vmatpush.bf16.msra.mxu0 %v1239
        %1249 = vmatmul.bf16.gmra.mxu0 %v1236
        %v1250 = vpop.f32.mrf.mxu0
        %v1251 = vadd.f32 0.0, %v1250
        %v1252 = vpop.f32.mrf.mxu0
        %1253 = vdwg.mxu0
        %v1254 = vmul.f32 %v1104, %v1069
        %v1255 = vmul.f32 %v1125, %v1070
        %v1256 = vmul.f32 %v1146, %v1071
        %v1257 = vmul.f32 %v1167, %v1072
        %v1258 = vmul.f32 %v1188, %v1073
        %v1259 = vmul.f32 %v1209, %v1074
        %v1260 = vmul.f32 %v1230, %v1075
        %v1261 = vmul.f32 %v1251, %v1076
        %1264 = vrot.lane.b32.xlu0 %v1256, 8
        %v1265 = vpop.permute.xlu0 %1264
        %1266 = vrot.lane.b32.xlu0 %v1257, 8
        %v1267 = vpop.permute.xlu0 %1266
        %1272 = vrot.lane.b32.xlu0 %v1258, 16
        %v1273 = vpop.permute.xlu0 %1272
        %1274 = vrot.lane.b32.xlu0 %v1259, 16
        %v1275 = vpop.permute.xlu0 %1274
        %1280 = vrot.lane.b32.xlu0 %v1260, 24
        %v1281 = vpop.permute.xlu0 %1280
        %1282 = vrot.lane.b32.xlu0 %v1261, 24
        %v1283 = vpop.permute.xlu0 %1282
        %v1286 = vsel %vm786, %v1254, %v1265
        %v1287 = vsel %vm786, %v1255, %v1267
        %vm1288 = vcmask 130048
        %v1289 = vsel %vm1288, %v1286, %v1273
        %v1290 = vsel %vm1288, %v1287, %v1275
        %vm1291 = vcmask 195584
        %v1292 = vsel %vm1291, %v1289, %v1281
        %v1293 = vsel %vm1291, %v1290, %v1283
        %v1294 = vpack.c.bf16 %v1293, %v1292
        %v1295 = vld [vmem:[%s612] sm:$0xf]
        %v1296 = vld [vmem:[%s612 + $0x4] sm:$0xf]
        %v1297 = vld [vmem:[%s612 + $0x8] sm:$0xf]
        %v1298 = vld [vmem:[%s612 + $0xc] sm:$0xf]
        %v1299 = vld [vmem:[%s615] sm:$0x1]
        %v1301 = vperm.slane %v1299, 0
        %v1307 = vunpack.c.l.b16 %v1295
        %v1308 = vunpack.c.l.b16 %v1296
        %v1309 = vunpack.c.l.b16 %v1297
        %v1310 = vunpack.c.l.b16 %v1298
        %v1311 = vpack.c.b16 %v1308, %v1307
        %v1312 = vpack.c.b16 %v1310, %v1309
        %v1316 = vsel %vm651, %v1294, 0
        %1318 = vmatpush.bf16.msra.mxu0 0
        %1319 = vmatpush.bf16.msra.mxu0 0
        %1320 = vmatpush.bf16.msra.mxu0 0
        %1321 = vmatpush.bf16.msra.mxu0 0
        %1322 = vmatpush.bf16.msra.mxu0 0
        %1323 = vmatpush.bf16.msra.mxu0 0
        %1324 = vmatpush.bf16.msra.mxu0 %v1312
        %1325 = vmatpush.bf16.msra.mxu0 %v1311
        %1326 = vmatmul.bf16.gmra.mxu0 %v1316
        %v1327 = vpop.f32.mrf.mxu0
        %v1328 = vadd.f32 %v1301, %v1327
        %v1329 = vpop.f32.mrf.mxu0
        %v1330 = vadd.f32 %v1301, %v1329
        %1331 = vdwg.mxu0
        %v1332 = vadd.f32 %v649, %v1328
        %v1333 = vadd.f32 %v650, %v1330
        %v1334 = vsel %vm651, %v1332, 0.0
        %1335 = vadd.xlane.f32.xlu0 %v1334
        %v1336 = vpop.xlane.xlu0 %1335
        %v1337 = vsel %vm651, %v1333, 0.0
        %1338 = vadd.xlane.f32.xlu0 %v1337
        %v1339 = vpop.xlane.xlu0 %1338
        %v1340 = vmul.f32 %v1336, %v664
        %v1341 = vmul.f32 %v1339, %v664
        %v1342 = vsub.f32 %v1332, %v1340
        %v1343 = vsub.f32 %v1333, %v1341
        %v1344 = vmul.f32 %v1342, %v1342
        %v1345 = vmul.f32 %v1343, %v1343
        %v1346 = vsel %vm651, %v1344, 0.0
        %1347 = vadd.xlane.f32.xlu0 %v1346
        %v1348 = vpop.xlane.xlu0 %1347
        %v1349 = vsel %vm651, %v1345, 0.0
        %1350 = vadd.xlane.f32.xlu0 %v1349
        %v1351 = vpop.xlane.xlu0 %1350
        %v1352 = vmul.f32 %v1348, %v664
        %v1353 = vmul.f32 %v1351, %v664
        %v1354 = vadd.f32 %v1352, 1e-05
        %v1355 = vadd.f32 %v1353, 1e-05
        %v1356 = vrsqrt.pop %v1354
        %v1357 = vmul.f32 %v1356, %v1354
        %v1358 = vmul.f32 %v1357, %v1356
        %v1359 = vmul.f32 0.5, %v1358
        %v1360 = vsub.f32 1.5, %v1359
        %v1361 = vmul.f32 %v1356, %v1360
        %vm1362 = vweird.f32 %v1354
        %vm1363 = vweird.f32 %v1356
        %vm1364 = vmor %vm1362, %vm1363
        %v1365 = vsel %vm1364, %v1356, %v1361
        %v1366 = vrsqrt.pop %v1355
        %v1367 = vmul.f32 %v1366, %v1355
        %v1368 = vmul.f32 %v1367, %v1366
        %v1369 = vmul.f32 0.5, %v1368
        %v1370 = vsub.f32 1.5, %v1369
        %v1371 = vmul.f32 %v1366, %v1370
        %vm1372 = vweird.f32 %v1355
        %vm1373 = vweird.f32 %v1366
        %vm1374 = vmor %vm1372, %vm1373
        %v1375 = vsel %vm1374, %v1366, %v1371
        %v1376 = vmul.f32 %v1342, %v1365
        %v1377 = vmul.f32 %v1343, %v1375
        %v1378 = vld [vmem:[%s618] sm:$0x1]
        %v1380 = vperm.slane %v1378, 0
        %v1382 = vmul.f32 %v1376, %v1380
        %v1383 = vmul.f32 %v1377, %v1380
        %v1384 = vld [vmem:[%s621] sm:$0x1]
        %v1386 = vperm.slane %v1384, 0
        %v1388 = vadd.f32 %v1382, %v1386
        %v1389 = vadd.f32 %v1383, %v1386
        %v1390 = vpack.c.bf16 %v1389, %v1388
        %v1391 = vld [vmem:[%s626] sm:$0xf]
        %v1392 = vld [vmem:[%s626 + $0x4] sm:$0xf]
        %v1393 = vld [vmem:[%s626 + $0x8] sm:$0xf]
        %v1394 = vld [vmem:[%s626 + $0xc] sm:$0xf]
        %v1395 = vld [vmem:[%s629] sm:$0x1]
        %v1397 = vperm.slane %v1395, 0
        %v1403 = vunpack.c.l.b16 %v1391
        %v1404 = vunpack.c.l.b16 %v1392
        %v1405 = vunpack.c.l.b16 %v1393
        %v1406 = vunpack.c.l.b16 %v1394
        %v1407 = vpack.c.b16 %v1404, %v1403
        %v1408 = vpack.c.b16 %v1406, %v1405
        %v1412 = vsel %vm651, %v1390, 0
        %1414 = vmatpush.bf16.msra.mxu0 0
        %1415 = vmatpush.bf16.msra.mxu0 0
        %1416 = vmatpush.bf16.msra.mxu0 0
        %1417 = vmatpush.bf16.msra.mxu0 0
        %1418 = vmatpush.bf16.msra.mxu0 0
        %1419 = vmatpush.bf16.msra.mxu0 0
        %1420 = vmatpush.bf16.msra.mxu0 %v1408
        %1421 = vmatpush.bf16.msra.mxu0 %v1407
        %1422 = vmatmul.bf16.gmra.mxu0 %v1412
        %v1423 = vpop.f32.mrf.mxu0
        %v1424 = vadd.f32 %v1397, %v1423
        %v1425 = vpop.f32.mrf.mxu0
        %v1426 = vadd.f32 %v1397, %v1425
        %1427 = vdwg.mxu0
        %v1428 = vmul.f32 %v1424, 1.702
        %v1429 = vmul.f32 %v1426, 1.702
        %v1430 = vxor.u32 %v1428, 2147483648
        %v1431 = vxor.u32 %v1429, 2147483648
        %v1432 = vmul.f32 %v1430, 1.442695
        %v1433 = vpow.pop %v1432
        %v1434 = vmul.f32 %v1431, 1.442695
        %v1435 = vpow.pop %v1434
        %v1436 = vadd.f32 %v1433, 1.0
        %v1437 = vadd.f32 %v1435, 1.0
        %v1438 = vrcp.pop %v1436
        %v1439 = vmul.f32 %v1436, %v1438
        %v1440 = vsub.f32 1.0, %v1439
        %v1441 = vmul.f32 %v1438, %v1440
        %v1442 = vadd.f32 %v1438, %v1441
        %vm1443 = vweird.f32 %v1436
        %vm1444 = vweird.f32 %v1438
        %vm1445 = vmor %vm1443, %vm1444
        %v1446 = vsel %vm1445, %v1438, %v1442
        %v1447 = vand.u32 2147483647, %v1436
        %vm1448 = vcmp.eq.f32.partialorder %v1447, 8.507059e+37
        %v1449 = vand.u32 %v1436, 2147483648
        %v1450 = vor.u32 1.1754944e-38, %v1449
        %v1451 = vsel %vm1448, %v1450, %v1446
        %v1452 = vmul.f32 1.0, %v1451
        %v1453 = vrcp.pop %v1437
        %v1454 = vmul.f32 %v1437, %v1453
        %v1455 = vsub.f32 1.0, %v1454
        %v1456 = vmul.f32 %v1453, %v1455
        %v1457 = vadd.f32 %v1453, %v1456
        %vm1458 = vweird.f32 %v1437
        %vm1459 = vweird.f32 %v1453
        %vm1460 = vmor %vm1458, %vm1459
        %v1461 = vsel %vm1460, %v1453, %v1457
        %v1462 = vand.u32 2147483647, %v1437
        %vm1463 = vcmp.eq.f32.partialorder %v1462, 8.507059e+37
        %v1464 = vand.u32 %v1437, 2147483648
        %v1465 = vor.u32 1.1754944e-38, %v1464
        %v1466 = vsel %vm1463, %v1465, %v1461
        %v1467 = vmul.f32 1.0, %v1466
        %v1468 = vmul.f32 %v1424, %v1452
        %v1469 = vmul.f32 %v1426, %v1467
        %v1470 = vpack.c.bf16 %v1469, %v1468
        %v1471 = vld [vmem:[%s634] sm:$0xf]
        %v1472 = vld [vmem:[%s634 + $0x4] sm:$0xf]
        %v1473 = vld [vmem:[%s634 + $0x8] sm:$0xf]
        %v1474 = vld [vmem:[%s634 + $0xc] sm:$0xf]
        %v1475 = vld [vmem:[%s634 + $0x10] sm:$0xf]
        %v1476 = vld [vmem:[%s634 + $0x14] sm:$0xf]
        %v1477 = vld [vmem:[%s634 + $0x18] sm:$0xf]
        %v1478 = vld [vmem:[%s634 + $0x1c] sm:$0xf]
        %v1479 = vld [vmem:[%s634 + $0x20] sm:$0xf]
        %v1480 = vld [vmem:[%s634 + $0x24] sm:$0xf]
        %v1481 = vld [vmem:[%s634 + $0x28] sm:$0xf]
        %v1482 = vld [vmem:[%s634 + $0x2c] sm:$0xf]
        %v1483 = vld [vmem:[%s634 + $0x30] sm:$0xf]
        %v1484 = vld [vmem:[%s634 + $0x34] sm:$0xf]
        %v1485 = vld [vmem:[%s634 + $0x38] sm:$0xf]
        %v1486 = vld [vmem:[%s634 + $0x3c] sm:$0xf]
        %v1487 = vld [vmem:[%s637] sm:$0x1]
        %v1489 = vperm.slane %v1487, 0
        %v1507 = vunpack.c.l.b16 %v1471
        %v1508 = vunpack.c.l.b16 %v1472
        %v1509 = vunpack.c.l.b16 %v1473
        %v1510 = vunpack.c.l.b16 %v1474
        %v1511 = vunpack.c.l.b16 %v1475
        %v1512 = vunpack.c.l.b16 %v1476
        %v1513 = vunpack.c.l.b16 %v1477
        %v1514 = vunpack.c.l.b16 %v1478
        %v1515 = vunpack.c.l.b16 %v1479
        %v1516 = vunpack.c.l.b16 %v1480
        %v1517 = vunpack.c.l.b16 %v1481
        %v1518 = vunpack.c.l.b16 %v1482
        %v1519 = vunpack.c.l.b16 %v1483
        %v1520 = vunpack.c.l.b16 %v1484
        %v1521 = vunpack.c.l.b16 %v1485
        %v1522 = vunpack.c.l.b16 %v1486
        %v1523 = vpack.c.b16 %v1508, %v1507
        %v1524 = vpack.c.b16 %v1510, %v1509
        %v1525 = vpack.c.b16 %v1512, %v1511
        %v1526 = vpack.c.b16 %v1514, %v1513
        %v1527 = vpack.c.b16 %v1516, %v1515
        %v1528 = vpack.c.b16 %v1518, %v1517
        %v1529 = vpack.c.b16 %v1520, %v1519
        %v1530 = vpack.c.b16 %v1522, %v1521
        %1539 = vmatpush.bf16.msra.mxu0 %v1530
        %1540 = vmatpush.bf16.msra.mxu0 %v1529
        %1541 = vmatpush.bf16.msra.mxu0 %v1528
        %1542 = vmatpush.bf16.msra.mxu0 %v1527
        %1543 = vmatpush.bf16.msra.mxu0 %v1526
        %1544 = vmatpush.bf16.msra.mxu0 %v1525
        %1545 = vmatpush.bf16.msra.mxu0 %v1524
        %1546 = vmatpush.bf16.msra.mxu0 %v1523
        %1547 = vmatmul.bf16.gmra.mxu0 %v1470
        %v1548 = vpop.f32.mrf.mxu0
        %v1549 = vadd.f32 %v1489, %v1548
        %v1550 = vpop.f32.mrf.mxu0
        %v1551 = vadd.f32 %v1489, %v1550
        %1552 = vdwg.mxu0
        %v1553 = vadd.f32 %v1332, %v1549
        %v1554 = vadd.f32 %v1333, %v1551
        %1555 = vst.msk [vmem:[#allocation2] sm:$0xff] %vm651, %v1553
        %1556 = vst.msk [vmem:[#allocation2 + $0x8] sm:$0xff] %vm651, %v1554
        // Predicated region
        $region77: #{tpu_custom_call.1} parent=71 // pred_check
          %p1557 = pneg %p393
        $region78: #{tpu_custom_call.1} parent=71 // pred_check_branch
          %1559 = sbr.rel (%p1557) target = $region80
        $region79: #{tpu_custom_call.1} parent=71 // pred_region
          %s1560 = smul.u32 2, %s29
          %1562 = vsyncadd [#allocation3], 0
          %s1563 = smul.addr %s1560, 8
          %s1564 = scalar_lea.hbm %s13, %s1563
          %s1565 = sshll.u32 [#allocation2], 4
          %s1566 = int_to_ptr.vmem [resolvable:$true] %s1565
          %s1567 = sshll.u32 %s1564, 4
          %s1568 = int_to_ptr.hbm [resolvable:$true] %s1567
          %1573 = dma.vmem_to_hbm [thread:$0]  %s1566, 256, %s1568, [#allocation3], 128, 128, 8
        $region80: #{tpu_custom_call.1} parent=71 // pred_fallthru
          _
        // Predicated region
        $region81: #{tpu_custom_call.1} parent=71 // pred_check
          %p1574 = pneg %p393
        $region82: #{tpu_custom_call.1} parent=71 // pred_check_branch
          %1576 = sbr.rel (%p1574) target = $region84
        $region83: #{tpu_custom_call.1} parent=71 // pred_region
          %1578 = dma.done [#allocation3], 256
        $region84: #{tpu_custom_call.1} parent=71 // pred_fallthru
          _
      $region72: #{tpu_custom_call.1} parent=5 // pred_fallthru
        _
      %p1579 = scmp.le.s32.totalorder 2, %s20
      // Predicated region
      $region85: #{tpu_custom_call.1} parent=5 // pred_check
        %p1580 = pneg %p1579
      $region86: #{tpu_custom_call.1} parent=5 // pred_check_branch
        %1582 = sbr.rel (%p1580) target = $region88
      $region87: #{tpu_custom_call.1} parent=5 // pred_region
        %s1583 = ssub.s32 %s20, 2
      $region88: #{tpu_custom_call.1} parent=5 // pred_fallthru
        _
    $region6: #{tpu_custom_call.1} parent=1 // loop_footer
      %s24 = sadd.s32 1, %s20
    $region7: #{tpu_custom_call.1} parent=1 // loop_footer_branch
      %19 = sbr.rel target = $region3
    $region8: #{tpu_custom_call.1} parent=1 // loop_exit
      _
    %1584 = vsyncpa [#allocation3], 1
    %s1585 = scalar_lea.sflag [#allocation3], 1
    %1586 = vsyncpa %s1585, 1

</llo_original>
